<compile_context>
chip_gen: v5e
topology: v5e:2x2
jax: 0.10.0
libtpu: 0.0.40
codegen_flags: <defaults>
</compile_context>

<pallas_src>
import functools
import math

import jax
import jax.numpy as jnp
from jax.experimental import pallas as pl
from jax.experimental.pallas import tpu as pltpu

EPS = 1e-12
LOG_EPS = math.log(EPS)              # PyTorch's log(x + EPS) saturation level
NUM_CLASSES = 5
LANES = 128
WIDTH = NUM_CLASSES * LANES          # 640 = lcm(5, 128): lane-dense & class-aligned
MAX_TILE_ROWS = 2048                 # 2048 x 640 f32 = 5 MiB per input block
NUM_CORES = 2                        # megacore split on v7x; harmless elsewhere
WEIGHTS = (0.75, 0.247, 0.727, 0.246, 0.00225)


def _my_loss_kernel(score_ref, target_ref, w_ref, out_ref, acc_ref, *,
                    tile_rows, tiles_per_core, n_tiles, full_rows, rem_lanes,
                    needs_mask, binary_targets):
    # score_ref/target_ref: (tile_rows, WIDTH) in VMEM (input dtype, upcast here)
    # w_ref:                (1, WIDTH) f32 in VMEM (per-class constant, tiled x128)
    # out_ref:              (1, 1) f32 SMEM block (per-core partial sum)
    # acc_ref:              (1, WIDTH) f32 VMEM scratch (per-core vector accumulator)
    c = pl.program_id(0)               # core split (parallel axis)
    i = pl.program_id(1)               # row-tile within this core (arbitrary axis)
    b = c * tiles_per_core + i         # global (unclamped) row-tile index

    @pl.when(i == 0)
    def _():
        acc_ref[...] = jnp.zeros_like(acc_ref)

    x = score_ref[...].astype(jnp.float32)
    t = target_ref[...].astype(jnp.float32)
    w = w_ref[...]                     # (1, WIDTH) -> broadcast over rows

    # Stable log-sigmoid: log s = min(x,0) - log(1+exp(-|x|)),
    #                 log(1-s) = -max(x,0) - log(1+exp(-|x|)).
    # Clamped at log(EPS) to keep PyTorch's log(. + EPS) tail behavior.
    soft = jnp.log(1.0 + jnp.exp(-jnp.abs(x)))
    log_s = jnp.maximum(jnp.minimum(x, 0.0) - soft, LOG_EPS)
    log_1ms = jnp.maximum(-jnp.maximum(x, 0.0) - soft, LOG_EPS)

    if binary_targets:
        # w_ref holds exp(1 - weights); for t in {0,1} this equals the exact
        # exp(t + (1-2t)*w) weighting of the t-term (the t=0 term has weight 1
        # times zero anyway), so the per-element exp disappears.
        loss = (t * w) * log_s + (1.0 - t) * log_1ms
    else:
        cur_w = jnp.exp(t + (1.0 - 2.0 * t) * w)     # exact module formula
        loss = cur_w * (t * log_s) + (1.0 - t) * log_1ms

    def accumulate(v):
        acc_ref[...] += jnp.sum(v, axis=0, keepdims=True)

    if needs_mask:
        # Only the last real block (and clamped overhang blocks) can contain
        # padded / out-of-bounds rows; every other step skips the iota/select.
        @pl.when(b < n_tiles - 1)
        def _():
            accumulate(loss)

        @pl.when(b >= n_tiles - 1)
        def _():
            g_row = b * tile_rows + jax.lax.broadcasted_iota(
                jnp.int32, (tile_rows, WIDTH), 0)
            lane = jax.lax.broadcasted_iota(jnp.int32, (tile_rows, WIDTH), 1)
            valid = (g_row < full_rows) | ((g_row == full_rows) & (lane < rem_lanes))
            accumulate(jnp.where(valid, loss, 0.0))
    else:
        accumulate(loss)

    @pl.when(i == pl.num_programs(1) - 1)
    def _():
        out_ref[0, 0] = jnp.sum(acc_ref[...])   # one-time cross-lane reduce


@functools.partial(jax.jit, static_argnames=("binary_targets",))
def my_loss(score, target, binary_targets=False):
    """score, target: arrays with trailing dim 5 (any float dtype). Scalar f32 loss."""
    score = jnp.asarray(score)        # keep caller dtype (bf16 stays bf16 in HBM)
    target = jnp.asarray(target)
    assert score.shape == target.shape and score.shape[-1] == NUM_CLASSES

    n_valid = int(score.size)                    # true element count
    rows_needed = pl.cdiv(n_valid, WIDTH)

    copy_free = (n_valid % WIDTH == 0) and (rows_needed >= 8)
    if copy_free:
        rows_total = rows_needed                             # plain reshape, no copy
        tile_rows = min(MAX_TILE_ROWS, (rows_total // 8) * 8)
    else:
        rows_total = max(8, ((rows_needed + 7) // 8) * 8)    # tiny tail pad only
        tile_rows = min(MAX_TILE_ROWS, rows_total)
    n_padded = rows_total * WIDTH

    n_tiles = pl.cdiv(rows_total, tile_rows)
    num_splits = min(NUM_CORES, n_tiles)
    tiles_per_core = pl.cdiv(n_tiles, num_splits)

    needs_mask = (n_padded != n_valid
                  or rows_total % tile_rows != 0
                  or num_splits * tiles_per_core != n_tiles)

    def to_slab(a):
        flat = a.reshape(-1)
        if n_padded != n_valid:        # only a < WIDTH*8 tail, never a full slab
            flat = jnp.pad(flat, (0, n_padded - n_valid))
        return flat.reshape(rows_total, WIDTH)

    score2d = to_slab(score)
    target2d = to_slab(target)

    w_base = jnp.asarray(WEIGHTS, jnp.float32)
    if binary_targets:
        w_base = jnp.exp(1.0 - w_base)             # fold the exp out of the kernel
    w_row = jnp.tile(w_base, LANES).reshape(1, WIDTH)   # class pattern x128 lanes

    if num_splits * tiles_per_core == n_tiles:
        data_map = lambda c, i, tpc=tiles_per_core: (c * tpc + i, 0)
    else:  # clamp overhang steps of the split; their contribution is fully masked
        data_map = lambda c, i, tpc=tiles_per_core, nt=n_tiles: (
            jnp.minimum(c * tpc + i, nt - 1), 0)

    kernel = functools.partial(
        _my_loss_kernel,
        tile_rows=tile_rows, tiles_per_core=tiles_per_core, n_tiles=n_tiles,
        full_rows=n_valid // WIDTH, rem_lanes=n_valid % WIDTH,
        needs_mask=needs_mask, binary_targets=binary_targets)

    in_bytes = (jnp.dtype(score.dtype).itemsize
                + jnp.dtype(target.dtype).itemsize) * n_valid
    cost = pl.CostEstimate(
        flops=12 * n_valid,
        transcendentals=(2 if binary_targets else 3) * n_valid,
        bytes_accessed=in_bytes + 4 * WIDTH + 8 * num_splits)

    block_bytes = tile_rows * WIDTH * (jnp.dtype(score.dtype).itemsize
                                       + jnp.dtype(target.dtype).itemsize)
    vmem_limit = int(min(64 * 1024 * 1024,
                         max(32 * 1024 * 1024, 2 * block_bytes + (2 << 20))))

    partials = pl.pallas_call(
        kernel,
        out_shape=jax.ShapeDtypeStruct((num_splits, 1), jnp.float32),
        grid_spec=pltpu.PrefetchScalarGridSpec(
            num_scalar_prefetch=0,
            grid=(num_splits, tiles_per_core),
            in_specs=[
                pl.BlockSpec((tile_rows, WIDTH), data_map),      # Score
                pl.BlockSpec((tile_rows, WIDTH), data_map),      # Target
                pl.BlockSpec((1, WIDTH), lambda c, i: (0, 0)),   # tiled weights
            ],
            out_specs=pl.BlockSpec((1, 1), lambda c, i: (c, 0),
                                   memory_space=pltpu.SMEM),
            scratch_shapes=[pltpu.VMEM((1, WIDTH), jnp.float32)],
        ),
        compiler_params=pltpu.CompilerParams(
            dimension_semantics=("parallel", "arbitrary"),
            vmem_limit_bytes=vmem_limit,
        ),
        cost_estimate=cost,
    )(score2d, target2d, w_row)

    return -jnp.sum(partials) / n_valid


def _reference(score, target):
    # Pure-JAX reference mirroring the PyTorch forward (f32).
    s = jax.nn.sigmoid(jnp.asarray(score, jnp.float32))
    t = jnp.asarray(target, jnp.float32)
    w = jnp.asarray(WEIGHTS, jnp.float32)
    cur_w = jnp.exp(t + (1.0 - 2.0 * t) * w)
    loss = cur_w * (t * jnp.log(s + EPS)) + (1.0 - t) * jnp.log(1.0 - s + EPS)
    return -jnp.mean(loss)


if __name__ == "__main__":
    key = jax.random.PRNGKey(0)
    k1, k2 = jax.random.split(key)
    # Small shapes consistent with the module: (batch=8, seq=8, classes=5).
    score = jax.random.normal(k1, (8, 8, 5), dtype=jnp.float32)
    target = (jax.random.uniform(k2, (8, 8, 5)) > 0.5).astype(jnp.float32)

    out_gen = my_loss(score, target)                       # general / soft-target path
    out_bin = my_loss(score, target, binary_targets=True)  # binary fast path
    jax.block_until_ready((out_gen, out_bin))

    ref = _reference(score, target)
    assert jnp.allclose(out_gen, ref, rtol=1e-5, atol=1e-6), (out_gen, ref)
    assert jnp.allclose(out_bin, ref, rtol=1e-5, atol=1e-6), (out_bin, ref)

    # Copy-free path (flat size is a multiple of 640): plain reshape, no mask.
    score2 = jax.random.normal(k1, (1024, 5), dtype=jnp.float32)
    target2 = (jax.random.uniform(k2, (1024, 5)) > 0.5).astype(jnp.float32)
    out2 = my_loss(score2, target2)
    jax.block_until_ready(out2)
    assert jnp.allclose(out2, _reference(score2, target2), rtol=1e-5, atol=1e-6)

    print("KERNEL_OK")
</pallas_src>

<mosaic_0001>
module attributes {stable_mosaic.version = 11 : i64} {
  func.func @_my_loss_kernel(%arg0: i32, %arg1: i32, %arg2: memref<8x640xf32, #tpu.memory_space<vmem>>, %arg3: memref<8x640xf32, #tpu.memory_space<vmem>>, %arg4: memref<1x640xf32, #tpu.memory_space<vmem>>, %arg5: memref<1x1xf32, #tpu.memory_space<smem>>, %arg6: memref<1x640xf32, #tpu.memory_space<vmem>>) attributes {dimension_semantics = [#tpu.dimension_semantics<parallel>, #tpu.dimension_semantics<arbitrary>], iteration_bounds = array<i64: 1, 1>, scalar_prefetch = 0 : i64, scratch_operands = 1 : i64, tpu.core_type = #tpu.core_type<tc>, window_params = [{transform_indices = @transform_0, window_bounds = array<i64: 8, 640>}, {transform_indices = @transform_1, window_bounds = array<i64: 8, 640>}, {pipeline_mode = #tpu.pipeline_mode<synchronous>, transform_indices = @transform_2, window_bounds = array<i64: 1, 640>}, {transform_indices = @transform_3, window_bounds = array<i64: 1, 1>}]} {
    %c1_i32 = arith.constant 1 : i32
    %0 = arith.muli %arg0, %c1_i32 : i32
    %1 = arith.addi %0, %arg1 : i32
    %c0_i32 = arith.constant 0 : i32
    %2 = arith.cmpi eq, %arg1, %c0_i32 : i32
    %3 = arith.extui %2 : i1 to i32
    %c0_i32_0 = arith.constant 0 : i32
    %4 = arith.cmpi ne, %3, %c0_i32_0 : i32
    scf.if %4 {
      %cst_21 = arith.constant 0.000000e+00 : f32
      %50 = vector.broadcast %cst_21 : f32 to vector<1x640xf32>
      %c0_22 = arith.constant 0 : index
      %c0_23 = arith.constant 0 : index
      %51 = vector.load %arg6[%c0_22, %c0_23] : memref<1x640xf32, #tpu.memory_space<vmem>>, vector<1x640xf32>
      tpu.vector_store %arg6[%c0_22, %c0_23], %50 {strides = array<i32>} : memref<1x640xf32, #tpu.memory_space<vmem>>, vector<1x640xf32>,
    } else {
    }
    %c0 = arith.constant 0 : index
    %c0_1 = arith.constant 0 : index
    %5 = vector.load %arg2[%c0, %c0_1] : memref<8x640xf32, #tpu.memory_space<vmem>>, vector<8x640xf32>
    %c0_2 = arith.constant 0 : index
    %c0_3 = arith.constant 0 : index
    %6 = vector.load %arg3[%c0_2, %c0_3] : memref<8x640xf32, #tpu.memory_space<vmem>>, vector<8x640xf32>
    %c0_4 = arith.constant 0 : index
    %c0_5 = arith.constant 0 : index
    %7 = vector.load %arg4[%c0_4, %c0_5] : memref<1x640xf32, #tpu.memory_space<vmem>>, vector<1x640xf32>
    %8 = math.absf %5 : vector<8x640xf32>
    %cst = arith.constant 0.000000e+00 : f32
    %9 = vector.broadcast %cst : f32 to vector<8x640xf32>
    %10 = arith.subf %9, %8 : vector<8x640xf32>
    %11 = math.exp %10 : vector<8x640xf32>
    %cst_6 = arith.constant 1.000000e+00 : f32
    %12 = vector.broadcast %cst_6 : f32 to vector<8x640xf32>
    %13 = arith.addf %12, %11 : vector<8x640xf32>
    %14 = math.log %13 : vector<8x640xf32>
    %cst_7 = arith.constant 0.000000e+00 : f32
    %15 = vector.broadcast %cst_7 : f32 to vector<8x640xf32>
    %16 = arith.minimumf %5, %15 : vector<8x640xf32>
    %17 = arith.subf %16, %14 : vector<8x640xf32>
    %cst_8 = arith.constant -27.6310215 : f32
    %18 = vector.broadcast %cst_8 : f32 to vector<8x640xf32>
    %19 = arith.maximumf %17, %18 : vector<8x640xf32>
    %cst_9 = arith.constant 0.000000e+00 : f32
    %20 = vector.broadcast %cst_9 : f32 to vector<8x640xf32>
    %21 = arith.maximumf %5, %20 : vector<8x640xf32>
    %cst_10 = arith.constant 0.000000e+00 : f32
    %22 = vector.broadcast %cst_10 : f32 to vector<8x640xf32>
    %23 = arith.subf %22, %21 : vector<8x640xf32>
    %24 = arith.subf %23, %14 : vector<8x640xf32>
    %cst_11 = arith.constant -27.6310215 : f32
    %25 = vector.broadcast %cst_11 : f32 to vector<8x640xf32>
    %26 = arith.maximumf %24, %25 : vector<8x640xf32>
    %cst_12 = arith.constant 2.000000e+00 : f32
    %27 = vector.broadcast %cst_12 : f32 to vector<8x640xf32>
    %28 = arith.mulf %27, %6 : vector<8x640xf32>
    %cst_13 = arith.constant 1.000000e+00 : f32
    %29 = vector.broadcast %cst_13 : f32 to vector<8x640xf32>
    %30 = arith.subf %29, %28 : vector<8x640xf32>
    %31 = vector.broadcast %7 : vector<1x640xf32> to vector<8x640xf32>
    %32 = arith.mulf %30, %31 : vector<8x640xf32>
    %33 = arith.addf %6, %32 : vector<8x640xf32>
    %34 = math.exp %33 : vector<8x640xf32>
    %35 = arith.mulf %6, %19 : vector<8x640xf32>
    %36 = arith.mulf %34, %35 : vector<8x640xf32>
    %cst_14 = arith.constant 1.000000e+00 : f32
    %37 = vector.broadcast %cst_14 : f32 to vector<8x640xf32>
    %38 = arith.subf %37, %6 : vector<8x640xf32>
    %39 = arith.mulf %38, %26 : vector<8x640xf32>
    %40 = arith.addf %36, %39 : vector<8x640xf32>
    %c0_i32_15 = arith.constant 0 : i32
    %41 = arith.cmpi slt, %1, %c0_i32_15 : i32
    %42 = arith.extui %41 : i1 to i32
    %c0_i32_16 = arith.constant 0 : i32
    %43 = arith.cmpi ne, %42, %c0_i32_16 : i32
    scf.if %43 {
      %c0_21 = arith.constant 0 : index
      %c0_22 = arith.constant 0 : index
      %50 = vector.load %arg6[%c0_21, %c0_22] : memref<1x640xf32, #tpu.memory_space<vmem>>, vector<1x640xf32>
      %cst_23 = arith.constant dense<0.000000e+00> : vector<640xf32>
      %51 = vector.multi_reduction <add>, %40, %cst_23 [0] : vector<8x640xf32> to vector<640xf32>
      %52 = vector.shape_cast %51 : vector<640xf32> to vector<1x640xf32>
      %53 = arith.addf %50, %52 : vector<1x640xf32>
      %c0_24 = arith.constant 0 : index
      %c0_25 = arith.constant 0 : index
      %54 = vector.load %arg6[%c0_24, %c0_25] : memref<1x640xf32, #tpu.memory_space<vmem>>, vector<1x640xf32>
      tpu.vector_store %arg6[%c0_24, %c0_25], %53 {strides = array<i32>} : memref<1x640xf32, #tpu.memory_space<vmem>>, vector<1x640xf32>,
    } else {
    }
    %c0_i32_17 = arith.constant 0 : i32
    %44 = arith.cmpi sge, %1, %c0_i32_17 : i32
    %45 = arith.extui %44 : i1 to i32
    %c0_i32_18 = arith.constant 0 : i32
    %46 = arith.cmpi ne, %45, %c0_i32_18 : i32
    scf.if %46 {
      %c8_i32 = arith.constant 8 : i32
      %50 = arith.muli %1, %c8_i32 : i32
      %51 = tpu.iota {dimensions = array<i32: 0>} : vector<8x640xi32>
      %52 = vector.broadcast %50 : i32 to vector<8x640xi32>
      %53 = arith.addi %52, %51 : vector<8x640xi32>
      %54 = tpu.iota {dimensions = array<i32: 1>} : vector<8x640xi32>
      %c0_i32_21 = arith.constant 0 : i32
      %55 = vector.broadcast %c0_i32_21 : i32 to vector<8x640xi32>
      %56 = arith.cmpi slt, %53, %55 : vector<8x640xi32>
      %c0_i32_22 = arith.constant 0 : i32
      %57 = vector.broadcast %c0_i32_22 : i32 to vector<8x640xi32>
      %58 = arith.cmpi eq, %53, %57 : vector<8x640xi32>
      %c320_i32 = arith.constant 320 : i32
      %59 = vector.broadcast %c320_i32 : i32 to vector<8x640xi32>
      %60 = arith.cmpi slt, %54, %59 : vector<8x640xi32>
      %61 = arith.andi %58, %60 : vector<8x640xi1>
      %62 = arith.ori %56, %61 : vector<8x640xi1>
      %cst_23 = arith.constant 0.000000e+00 : f32
      %63 = vector.broadcast %cst_23 : f32 to vector<8x640xf32>
      %64 = arith.select %62, %40, %63 : vector<8x640xi1>, vector<8x640xf32>
      %c0_24 = arith.constant 0 : index
      %c0_25 = arith.constant 0 : index
      %65 = vector.load %arg6[%c0_24, %c0_25] : memref<1x640xf32, #tpu.memory_space<vmem>>, vector<1x640xf32>
      %cst_26 = arith.constant dense<0.000000e+00> : vector<640xf32>
      %66 = vector.multi_reduction <add>, %64, %cst_26 [0] : vector<8x640xf32> to vector<640xf32>
      %67 = vector.shape_cast %66 : vector<640xf32> to vector<1x640xf32>
      %68 = arith.addf %65, %67 : vector<1x640xf32>
      %c0_27 = arith.constant 0 : index
      %c0_28 = arith.constant 0 : index
      %69 = vector.load %arg6[%c0_27, %c0_28] : memref<1x640xf32, #tpu.memory_space<vmem>>, vector<1x640xf32>
      tpu.vector_store %arg6[%c0_27, %c0_28], %68 {strides = array<i32>} : memref<1x640xf32, #tpu.memory_space<vmem>>, vector<1x640xf32>,
    } else {
    }
    %c0_i32_19 = arith.constant 0 : i32
    %47 = arith.cmpi eq, %arg1, %c0_i32_19 : i32
    %48 = arith.extui %47 : i1 to i32
    %c0_i32_20 = arith.constant 0 : i32
    %49 = arith.cmpi ne, %48, %c0_i32_20 : i32
    scf.if %49 {
      %c0_21 = arith.constant 0 : index
      %c0_22 = arith.constant 0 : index
      %50 = vector.load %arg6[%c0_21, %c0_22] : memref<1x640xf32, #tpu.memory_space<vmem>>, vector<1x640xf32>
      %51 = vector.shape_cast %50 : vector<1x640xf32> to vector<1x1x640xf32>
      %cst_23 = arith.constant dense<0.000000e+00> : vector<1xf32>
      %52 = vector.multi_reduction <add>, %51, %cst_23 [1, 2] : vector<1x1x640xf32> to vector<1xf32>
      %53 = vector.shape_cast %52 : vector<1xf32> to vector<1x1x1xf32>
      %54 = vector.extract %53[0, 0, 0] : f32 from vector<1x1x1xf32>
      %c0_24 = arith.constant 0 : index
      %c0_25 = arith.constant 0 : index
      %55 = memref.load %arg5[%c0_24, %c0_25] : memref<1x1xf32, #tpu.memory_space<smem>>
      memref.store %54, %arg5[%c0_24, %c0_25] : memref<1x1xf32, #tpu.memory_space<smem>>
    } else {
    }
    return
  }
  func.func @transform_0(%arg0: i32, %arg1: i32) -> (i32, i32) {
    %c1_i32 = arith.constant 1 : i32
    %0 = arith.muli %arg0, %c1_i32 : i32
    %1 = arith.addi %0, %arg1 : i32
    %c0_i32 = arith.constant 0 : i32
    %c0_i32_0 = arith.constant 0 : i32
    return %1, %c0_i32 : i32, i32
  }
  func.func @transform_1(%arg0: i32, %arg1: i32) -> (i32, i32) {
    %c1_i32 = arith.constant 1 : i32
    %0 = arith.muli %arg0, %c1_i32 : i32
    %1 = arith.addi %0, %arg1 : i32
    %c0_i32 = arith.constant 0 : i32
    %c0_i32_0 = arith.constant 0 : i32
    return %1, %c0_i32 : i32, i32
  }
  func.func @transform_2(%arg0: i32, %arg1: i32) -> (i32, i32) {
    %c0_i32 = arith.constant 0 : i32
    %c0_i32_0 = arith.constant 0 : i32
    %c0_i32_1 = arith.constant 0 : i32
    return %c0_i32, %c0_i32_0 : i32, i32
  }
  func.func @transform_3(%arg0: i32, %arg1: i32) -> (i32, i32) {
    %c0_i32 = arith.constant 0 : i32
    %c0_i32_0 = arith.constant 0 : i32
    return %arg0, %c0_i32 : i32, i32
  }
}

</mosaic_0001>

<llo_original>
// kernel: tile.6
$region0: #{tile.6}
  #allocation0 [shape = 's32[1]{0}', space=sflag, size = 0x4, scoped, tag = 'scoped memory for tile.6']
  %s0 = inlined_call_operand.vmem [shape: f32[5], index: 0, kind: input, shape index: {}]
  %s1 = inlined_call_operand.vmem [shape: f32[128,5], index: 1, kind: output, shape index: {}]
  // Predicated region
  $region2: #{tile.6} parent=0 // pred_check
    _
  $region3: #{tile.6} parent=0 // pred_check_branch
    %3 = sbr.rel (0) target = $region5
  $region4: #{tile.6} parent=0 // pred_region
    _
  $region5: #{tile.6} parent=0 // pred_fallthru
    _
  %v4 = vld [vmem:[%s0] ss:$0 sm:$0xff]
  %5 = vst [vmem:[%s1] sm:$0xff] %v4
  %s6 = scalar_lea.vmem %s1, 8
  %7 = vst [vmem:[%s6] sm:$0xff] %v4
  %s8 = scalar_lea.vmem %s1, 16
  %9 = vst [vmem:[%s8] sm:$0xff] %v4
  %s10 = scalar_lea.vmem %s1, 24
  %11 = vst [vmem:[%s10] sm:$0xff] %v4
  %s12 = scalar_lea.vmem %s1, 32
  %13 = vst [vmem:[%s12] sm:$0xff] %v4
  %s14 = scalar_lea.vmem %s1, 40
  %15 = vst [vmem:[%s14] sm:$0xff] %v4
  %s16 = scalar_lea.vmem %s1, 48
  %17 = vst [vmem:[%s16] sm:$0xff] %v4
  %s18 = scalar_lea.vmem %s1, 56
  %19 = vst [vmem:[%s18] sm:$0xff] %v4
  %s20 = scalar_lea.vmem %s1, 64
  %21 = vst [vmem:[%s20] sm:$0xff] %v4
  %s22 = scalar_lea.vmem %s1, 72
  %23 = vst [vmem:[%s22] sm:$0xff] %v4
  %s24 = scalar_lea.vmem %s1, 80
  %25 = vst [vmem:[%s24] sm:$0xff] %v4
  %s26 = scalar_lea.vmem %s1, 88
  %27 = vst [vmem:[%s26] sm:$0xff] %v4
  %s28 = scalar_lea.vmem %s1, 96
  %29 = vst [vmem:[%s28] sm:$0xff] %v4
  %s30 = scalar_lea.vmem %s1, 104
  %31 = vst [vmem:[%s30] sm:$0xff] %v4
  %s32 = scalar_lea.vmem %s1, 112
  %33 = vst [vmem:[%s32] sm:$0xff] %v4
  %s34 = scalar_lea.vmem %s1, 120
  %35 = vst [vmem:[%s34] sm:$0xff] %v4

// kernel: tile.7
$region0: #{tile.7}
  %s0 = inlined_call_operand.vmem [shape: f32[128,5], index: 0, kind: input, shape index: {}]
  %s1 = inlined_call_operand.vmem [shape: f32[1,640], index: 1, kind: output, shape index: {}]
  $region1: #{tile.7} parent=0
    #allocation0 [shape = 'u8[20480]{0}', space=vmem, size = 0x5000, scoped, tag = 'scoped mem for output reshape']
    %v2 = vld [vmem:[%s0] sm:$0x1]
    %vm3 = vcmask 39936
    %4 = vst.msk [vmem:[#allocation0] sm:$0x1] %vm3, %v2
    %s5 = scalar_lea.vmem %s0, 51
    %v6 = vld [vmem:[%s5] sm:$0x1]
    %s7 = scalar_lea.vmem %s0, 51
    %v8 = vld [vmem:[%s7] sm:$0x1]
    %vm9 = vcmask 7168
    %v10 = vsel %vm9, %v8, %v6
    %11 = vrot.lane.b32.xlu0 %v10, 127
    %v12 = vpop.permute.xlu0 %11
    %vm13 = vcmask 31744
    %s14 = scalar_lea.vmem [#allocation0], 16
    %15 = vst.msk [vmem:[%s14] sm:$0x1] %vm13, %v12
    %vm16 = vcmask 1048568
    %s17 = scalar_lea.vmem [#allocation0], 8
    %18 = vst.msk [vmem:[%s17] sm:$0x1] %vm16, %v12
    %s19 = scalar_lea.vmem %s0, 102
    %v20 = vld [vmem:[%s19] sm:$0x1]
    %s21 = scalar_lea.vmem %s0, 102
    %v22 = vld [vmem:[%s21] sm:$0x1]
    %vm23 = vcmask 15360
    %v24 = vsel %vm23, %v22, %v20
    %25 = vrot.lane.b32.xlu0 %v24, 126
    %v26 = vpop.permute.xlu0 %25
    %vm27 = vcmask 23552
    %s28 = scalar_lea.vmem [#allocation0], 32
    %29 = vst.msk [vmem:[%s28] sm:$0x1] %vm27, %v26
    %vm30 = vcmask 1048560
    %s31 = scalar_lea.vmem [#allocation0], 24
    %32 = vst.msk [vmem:[%s31] sm:$0x1] %vm30, %v26
    %s33 = scalar_lea.vmem %s0, 25
    %v34 = vld [vmem:[%s33] sm:$0x1]
    %s35 = scalar_lea.vmem %s0, 25
    %v36 = vld [vmem:[%s35] sm:$0x1]
    %vm37 = vcmask 23552
    %v38 = vsel %vm37, %v36, %v34
    %39 = vrot.lane.b32.xlu0 %v38, 125
    %v40 = vpop.permute.xlu0 %39
    %vm41 = vcmask 15360
    %s42 = scalar_lea.vmem [#allocation0], 8
    %43 = vst.msk [vmem:[%s42] sm:$0x1] %vm41, %v40
    %vm44 = vcmask 1048552
    %45 = vst.msk [vmem:[#allocation0] sm:$0x1] %vm44, %v40
    %s46 = scalar_lea.vmem %s0, 76
    %v47 = vld [vmem:[%s46] sm:$0x1]
    %s48 = scalar_lea.vmem %s0, 76
    %v49 = vld [vmem:[%s48] sm:$0x1]
    %vm50 = vcmask 31744
    %v51 = vsel %vm50, %v49, %v47
    %52 = vrot.lane.b32.xlu0 %v51, 124
    %v53 = vpop.permute.xlu0 %52
    %vm54 = vcmask 7168
    %s55 = scalar_lea.vmem [#allocation0], 24
    %56 = vst.msk [vmem:[%s55] sm:$0x1] %vm54, %v53
    %vm57 = vcmask 1048544
    %s58 = scalar_lea.vmem [#allocation0], 16
    %59 = vst.msk [vmem:[%s58] sm:$0x1] %vm57, %v53
    %s60 = scalar_lea.vmem %s0, 127
    %v61 = vld [vmem:[%s60] sm:$0x1]
    %62 = vrot.lane.b32.xlu0 %v61, 123
    %v63 = vpop.permute.xlu0 %62
    %vm64 = vcmask 1048536
    %s65 = scalar_lea.vmem [#allocation0], 32
    %66 = vst.msk [vmem:[%s65] sm:$0x1] %vm64, %v63
    %s67 = scalar_lea.vmem %s0, 50
    %v68 = vld [vmem:[%s67] sm:$0x1]
    %69 = vrot.lane.b32.xlu0 %v68, 122
    %v70 = vpop.permute.xlu0 %69
    %vm71 = vcmask 1040336
    %s72 = scalar_lea.vmem [#allocation0], 8
    %73 = vst.msk [vmem:[%s72] sm:$0x1] %vm71, %v70
    %s74 = scalar_lea.vmem %s0, 101
    %v75 = vld [vmem:[%s74] sm:$0x1]
    %76 = vrot.lane.b32.xlu0 %v75, 121
    %v77 = vpop.permute.xlu0 %76
    %vm78 = vcmask 1032136
    %s79 = scalar_lea.vmem [#allocation0], 24
    %80 = vst.msk [vmem:[%s79] sm:$0x1] %vm78, %v77
    %s81 = scalar_lea.vmem %s0, 24
    %v82 = vld [vmem:[%s81] sm:$0x1]
    %83 = vrot.lane.b32.xlu0 %v82, 120
    %v84 = vpop.permute.xlu0 %83
    %vm85 = vcmask 1023936
    %86 = vst.msk [vmem:[#allocation0] sm:$0x1] %vm85, %v84
    %s87 = scalar_lea.vmem %s0, 75
    %v88 = vld [vmem:[%s87] sm:$0x1]
    %89 = vrot.lane.b32.xlu0 %v88, 119
    %v90 = vpop.permute.xlu0 %89
    %vm91 = vcmask 1015736
    %s92 = scalar_lea.vmem [#allocation0], 16
    %93 = vst.msk [vmem:[%s92] sm:$0x1] %vm91, %v90
    %s94 = scalar_lea.vmem %s0, 126
    %v95 = vld [vmem:[%s94] sm:$0x1]
    %96 = vrot.lane.b32.xlu0 %v95, 118
    %v97 = vpop.permute.xlu0 %96
    %vm98 = vcmask 1007536
    %s99 = scalar_lea.vmem [#allocation0], 32
    %100 = vst.msk [vmem:[%s99] sm:$0x1] %vm98, %v97
    %s101 = scalar_lea.vmem %s0, 49
    %v102 = vld [vmem:[%s101] sm:$0x1]
    %103 = vrot.lane.b32.xlu0 %v102, 117
    %v104 = vpop.permute.xlu0 %103
    %vm105 = vcmask 999336
    %s106 = scalar_lea.vmem [#allocation0], 8
    %107 = vst.msk [vmem:[%s106] sm:$0x1] %vm105, %v104
    %s108 = scalar_lea.vmem %s0, 100
    %v109 = vld [vmem:[%s108] sm:$0x1]
    %110 = vrot.lane.b32.xlu0 %v109, 116
    %v111 = vpop.permute.xlu0 %110
    %vm112 = vcmask 991136
    %s113 = scalar_lea.vmem [#allocation0], 24
    %114 = vst.msk [vmem:[%s113] sm:$0x1] %vm112, %v111
    %s115 = scalar_lea.vmem %s0, 23
    %v116 = vld [vmem:[%s115] sm:$0x1]
    %117 = vrot.lane.b32.xlu0 %v116, 115
    %v118 = vpop.permute.xlu0 %117
    %vm119 = vcmask 982936
    %120 = vst.msk [vmem:[#allocation0] sm:$0x1] %vm119, %v118
    %s121 = scalar_lea.vmem %s0, 74
    %v122 = vld [vmem:[%s121] sm:$0x1]
    %123 = vrot.lane.b32.xlu0 %v122, 114
    %v124 = vpop.permute.xlu0 %123
    %vm125 = vcmask 974736
    %s126 = scalar_lea.vmem [#allocation0], 16
    %127 = vst.msk [vmem:[%s126] sm:$0x1] %vm125, %v124
    %s128 = scalar_lea.vmem %s0, 125
    %v129 = vld [vmem:[%s128] sm:$0x1]
    %130 = vrot.lane.b32.xlu0 %v129, 113
    %v131 = vpop.permute.xlu0 %130
    %vm132 = vcmask 966536
    %s133 = scalar_lea.vmem [#allocation0], 32
    %134 = vst.msk [vmem:[%s133] sm:$0x1] %vm132, %v131
    %s135 = scalar_lea.vmem %s0, 48
    %v136 = vld [vmem:[%s135] sm:$0x1]
    %137 = vrot.lane.b32.xlu0 %v136, 112
    %v138 = vpop.permute.xlu0 %137
    %vm139 = vcmask 958336
    %s140 = scalar_lea.vmem [#allocation0], 8
    %141 = vst.msk [vmem:[%s140] sm:$0x1] %vm139, %v138
    %s142 = scalar_lea.vmem %s0, 99
    %v143 = vld [vmem:[%s142] sm:$0x1]
    %144 = vrot.lane.b32.xlu0 %v143, 111
    %v145 = vpop.permute.xlu0 %144
    %vm146 = vcmask 950136
    %s147 = scalar_lea.vmem [#allocation0], 24
    %148 = vst.msk [vmem:[%s147] sm:$0x1] %vm146, %v145
    %s149 = scalar_lea.vmem %s0, 22
    %v150 = vld [vmem:[%s149] sm:$0x1]
    %151 = vrot.lane.b32.xlu0 %v150, 110
    %v152 = vpop.permute.xlu0 %151
    %vm153 = vcmask 941936
    %154 = vst.msk [vmem:[#allocation0] sm:$0x1] %vm153, %v152
    %s155 = scalar_lea.vmem %s0, 73
    %v156 = vld [vmem:[%s155] sm:$0x1]
    %157 = vrot.lane.b32.xlu0 %v156, 109
    %v158 = vpop.permute.xlu0 %157
    %vm159 = vcmask 933736
    %s160 = scalar_lea.vmem [#allocation0], 16
    %161 = vst.msk [vmem:[%s160] sm:$0x1] %vm159, %v158
    %s162 = scalar_lea.vmem %s0, 124
    %v163 = vld [vmem:[%s162] sm:$0x1]
    %164 = vrot.lane.b32.xlu0 %v163, 108
    %v165 = vpop.permute.xlu0 %164
    %vm166 = vcmask 925536
    %s167 = scalar_lea.vmem [#allocation0], 32
    %168 = vst.msk [vmem:[%s167] sm:$0x1] %vm166, %v165
    %s169 = scalar_lea.vmem %s0, 47
    %v170 = vld [vmem:[%s169] sm:$0x1]
    %171 = vrot.lane.b32.xlu0 %v170, 107
    %v172 = vpop.permute.xlu0 %171
    %vm173 = vcmask 917336
    %s174 = scalar_lea.vmem [#allocation0], 8
    %175 = vst.msk [vmem:[%s174] sm:$0x1] %vm173, %v172
    %s176 = scalar_lea.vmem %s0, 98
    %v177 = vld [vmem:[%s176] sm:$0x1]
    %178 = vrot.lane.b32.xlu0 %v177, 106
    %v179 = vpop.permute.xlu0 %178
    %vm180 = vcmask 909136
    %s181 = scalar_lea.vmem [#allocation0], 24
    %182 = vst.msk [vmem:[%s181] sm:$0x1] %vm180, %v179
    %s183 = scalar_lea.vmem %s0, 21
    %v184 = vld [vmem:[%s183] sm:$0x1]
    %185 = vrot.lane.b32.xlu0 %v184, 105
    %v186 = vpop.permute.xlu0 %185
    %vm187 = vcmask 900936
    %188 = vst.msk [vmem:[#allocation0] sm:$0x1] %vm187, %v186
    %s189 = scalar_lea.vmem %s0, 72
    %v190 = vld [vmem:[%s189] sm:$0x1]
    %191 = vrot.lane.b32.xlu0 %v190, 104
    %v192 = vpop.permute.xlu0 %191
    %vm193 = vcmask 892736
    %s194 = scalar_lea.vmem [#allocation0], 16
    %195 = vst.msk [vmem:[%s194] sm:$0x1] %vm193, %v192
    %s196 = scalar_lea.vmem %s0, 123
    %v197 = vld [vmem:[%s196] sm:$0x1]
    %198 = vrot.lane.b32.xlu0 %v197, 103
    %v199 = vpop.permute.xlu0 %198
    %vm200 = vcmask 884536
    %s201 = scalar_lea.vmem [#allocation0], 32
    %202 = vst.msk [vmem:[%s201] sm:$0x1] %vm200, %v199
    %s203 = scalar_lea.vmem %s0, 46
    %v204 = vld [vmem:[%s203] sm:$0x1]
    %205 = vrot.lane.b32.xlu0 %v204, 102
    %v206 = vpop.permute.xlu0 %205
    %vm207 = vcmask 876336
    %s208 = scalar_lea.vmem [#allocation0], 8
    %209 = vst.msk [vmem:[%s208] sm:$0x1] %vm207, %v206
    %s210 = scalar_lea.vmem %s0, 97
    %v211 = vld [vmem:[%s210] sm:$0x1]
    %212 = vrot.lane.b32.xlu0 %v211, 101
    %v213 = vpop.permute.xlu0 %212
    %vm214 = vcmask 868136
    %s215 = scalar_lea.vmem [#allocation0], 24
    %216 = vst.msk [vmem:[%s215] sm:$0x1] %vm214, %v213
    %s217 = scalar_lea.vmem %s0, 20
    %v218 = vld [vmem:[%s217] sm:$0x1]
    %219 = vrot.lane.b32.xlu0 %v218, 100
    %v220 = vpop.permute.xlu0 %219
    %vm221 = vcmask 859936
    %222 = vst.msk [vmem:[#allocation0] sm:$0x1] %vm221, %v220
    %s223 = scalar_lea.vmem %s0, 71
    %v224 = vld [vmem:[%s223] sm:$0x1]
    %225 = vrot.lane.b32.xlu0 %v224, 99
    %v226 = vpop.permute.xlu0 %225
    %vm227 = vcmask 851736
    %s228 = scalar_lea.vmem [#allocation0], 16
    %229 = vst.msk [vmem:[%s228] sm:$0x1] %vm227, %v226
    %s230 = scalar_lea.vmem %s0, 122
    %v231 = vld [vmem:[%s230] sm:$0x1]
    %232 = vrot.lane.b32.xlu0 %v231, 98
    %v233 = vpop.permute.xlu0 %232
    %vm234 = vcmask 843536
    %s235 = scalar_lea.vmem [#allocation0], 32
    %236 = vst.msk [vmem:[%s235] sm:$0x1] %vm234, %v233
    %s237 = scalar_lea.vmem %s0, 45
    %v238 = vld [vmem:[%s237] sm:$0x1]
    %239 = vrot.lane.b32.xlu0 %v238, 97
    %v240 = vpop.permute.xlu0 %239
    %vm241 = vcmask 835336
    %s242 = scalar_lea.vmem [#allocation0], 8
    %243 = vst.msk [vmem:[%s242] sm:$0x1] %vm241, %v240
    %s244 = scalar_lea.vmem %s0, 96
    %v245 = vld [vmem:[%s244] sm:$0x1]
    %246 = vrot.lane.b32.xlu0 %v245, 96
    %v247 = vpop.permute.xlu0 %246
    %vm248 = vcmask 827136
    %s249 = scalar_lea.vmem [#allocation0], 24
    %250 = vst.msk [vmem:[%s249] sm:$0x1] %vm248, %v247
    %s251 = scalar_lea.vmem %s0, 19
    %v252 = vld [vmem:[%s251] sm:$0x1]
    %253 = vrot.lane.b32.xlu0 %v252, 95
    %v254 = vpop.permute.xlu0 %253
    %vm255 = vcmask 818936
    %256 = vst.msk [vmem:[#allocation0] sm:$0x1] %vm255, %v254
    %s257 = scalar_lea.vmem %s0, 70
    %v258 = vld [vmem:[%s257] sm:$0x1]
    %259 = vrot.lane.b32.xlu0 %v258, 94
    %v260 = vpop.permute.xlu0 %259
    %vm261 = vcmask 810736
    %s262 = scalar_lea.vmem [#allocation0], 16
    %263 = vst.msk [vmem:[%s262] sm:$0x1] %vm261, %v260
    %s264 = scalar_lea.vmem %s0, 121
    %v265 = vld [vmem:[%s264] sm:$0x1]
    %266 = vrot.lane.b32.xlu0 %v265, 93
    %v267 = vpop.permute.xlu0 %266
    %vm268 = vcmask 802536
    %s269 = scalar_lea.vmem [#allocation0], 32
    %270 = vst.msk [vmem:[%s269] sm:$0x1] %vm268, %v267
    %s271 = scalar_lea.vmem %s0, 44
    %v272 = vld [vmem:[%s271] sm:$0x1]
    %273 = vrot.lane.b32.xlu0 %v272, 92
    %v274 = vpop.permute.xlu0 %273
    %vm275 = vcmask 794336
    %s276 = scalar_lea.vmem [#allocation0], 8
    %277 = vst.msk [vmem:[%s276] sm:$0x1] %vm275, %v274
    %s278 = scalar_lea.vmem %s0, 95
    %v279 = vld [vmem:[%s278] sm:$0x1]
    %280 = vrot.lane.b32.xlu0 %v279, 91
    %v281 = vpop.permute.xlu0 %280
    %vm282 = vcmask 786136
    %s283 = scalar_lea.vmem [#allocation0], 24
    %284 = vst.msk [vmem:[%s283] sm:$0x1] %vm282, %v281
    %s285 = scalar_lea.vmem %s0, 18
    %v286 = vld [vmem:[%s285] sm:$0x1]
    %287 = vrot.lane.b32.xlu0 %v286, 90
    %v288 = vpop.permute.xlu0 %287
    %vm289 = vcmask 777936
    %290 = vst.msk [vmem:[#allocation0] sm:$0x1] %vm289, %v288
    %s291 = scalar_lea.vmem %s0, 69
    %v292 = vld [vmem:[%s291] sm:$0x1]
    %293 = vrot.lane.b32.xlu0 %v292, 89
    %v294 = vpop.permute.xlu0 %293
    %vm295 = vcmask 769736
    %s296 = scalar_lea.vmem [#allocation0], 16
    %297 = vst.msk [vmem:[%s296] sm:$0x1] %vm295, %v294
    %s298 = scalar_lea.vmem %s0, 120
    %v299 = vld [vmem:[%s298] sm:$0x1]
    %300 = vrot.lane.b32.xlu0 %v299, 88
    %v301 = vpop.permute.xlu0 %300
    %vm302 = vcmask 761536
    %s303 = scalar_lea.vmem [#allocation0], 32
    %304 = vst.msk [vmem:[%s303] sm:$0x1] %vm302, %v301
    %s305 = scalar_lea.vmem %s0, 43
    %v306 = vld [vmem:[%s305] sm:$0x1]
    %307 = vrot.lane.b32.xlu0 %v306, 87
    %v308 = vpop.permute.xlu0 %307
    %vm309 = vcmask 753336
    %s310 = scalar_lea.vmem [#allocation0], 8
    %311 = vst.msk [vmem:[%s310] sm:$0x1] %vm309, %v308
    %s312 = scalar_lea.vmem %s0, 94
    %v313 = vld [vmem:[%s312] sm:$0x1]
    %314 = vrot.lane.b32.xlu0 %v313, 86
    %v315 = vpop.permute.xlu0 %314
    %vm316 = vcmask 745136
    %s317 = scalar_lea.vmem [#allocation0], 24
    %318 = vst.msk [vmem:[%s317] sm:$0x1] %vm316, %v315
    %s319 = scalar_lea.vmem %s0, 17
    %v320 = vld [vmem:[%s319] sm:$0x1]
    %321 = vrot.lane.b32.xlu0 %v320, 85
    %v322 = vpop.permute.xlu0 %321
    %vm323 = vcmask 736936
    %324 = vst.msk [vmem:[#allocation0] sm:$0x1] %vm323, %v322
    %s325 = scalar_lea.vmem %s0, 68
    %v326 = vld [vmem:[%s325] sm:$0x1]
    %327 = vrot.lane.b32.xlu0 %v326, 84
    %v328 = vpop.permute.xlu0 %327
    %vm329 = vcmask 728736
    %s330 = scalar_lea.vmem [#allocation0], 16
    %331 = vst.msk [vmem:[%s330] sm:$0x1] %vm329, %v328
    %s332 = scalar_lea.vmem %s0, 119
    %v333 = vld [vmem:[%s332] sm:$0x1]
    %334 = vrot.lane.b32.xlu0 %v333, 83
    %v335 = vpop.permute.xlu0 %334
    %vm336 = vcmask 720536
    %s337 = scalar_lea.vmem [#allocation0], 32
    %338 = vst.msk [vmem:[%s337] sm:$0x1] %vm336, %v335
    %s339 = scalar_lea.vmem %s0, 42
    %v340 = vld [vmem:[%s339] sm:$0x1]
    %341 = vrot.lane.b32.xlu0 %v340, 82
    %v342 = vpop.permute.xlu0 %341
    %vm343 = vcmask 712336
    %s344 = scalar_lea.vmem [#allocation0], 8
    %345 = vst.msk [vmem:[%s344] sm:$0x1] %vm343, %v342
    %s346 = scalar_lea.vmem %s0, 93
    %v347 = vld [vmem:[%s346] sm:$0x1]
    %348 = vrot.lane.b32.xlu0 %v347, 81
    %v349 = vpop.permute.xlu0 %348
    %vm350 = vcmask 704136
    %s351 = scalar_lea.vmem [#allocation0], 24
    %352 = vst.msk [vmem:[%s351] sm:$0x1] %vm350, %v349
    %s353 = scalar_lea.vmem %s0, 16
    %v354 = vld [vmem:[%s353] sm:$0x1]
    %355 = vrot.lane.b32.xlu0 %v354, 80
    %v356 = vpop.permute.xlu0 %355
    %vm357 = vcmask 695936
    %358 = vst.msk [vmem:[#allocation0] sm:$0x1] %vm357, %v356
    %s359 = scalar_lea.vmem %s0, 67
    %v360 = vld [vmem:[%s359] sm:$0x1]
    %361 = vrot.lane.b32.xlu0 %v360, 79
    %v362 = vpop.permute.xlu0 %361
    %vm363 = vcmask 687736
    %s364 = scalar_lea.vmem [#allocation0], 16
    %365 = vst.msk [vmem:[%s364] sm:$0x1] %vm363, %v362
    %s366 = scalar_lea.vmem %s0, 118
    %v367 = vld [vmem:[%s366] sm:$0x1]
    %368 = vrot.lane.b32.xlu0 %v367, 78
    %v369 = vpop.permute.xlu0 %368
    %vm370 = vcmask 679536
    %s371 = scalar_lea.vmem [#allocation0], 32
    %372 = vst.msk [vmem:[%s371] sm:$0x1] %vm370, %v369
    %s373 = scalar_lea.vmem %s0, 41
    %v374 = vld [vmem:[%s373] sm:$0x1]
    %375 = vrot.lane.b32.xlu0 %v374, 77
    %v376 = vpop.permute.xlu0 %375
    %vm377 = vcmask 671336
    %s378 = scalar_lea.vmem [#allocation0], 8
    %379 = vst.msk [vmem:[%s378] sm:$0x1] %vm377, %v376
    %s380 = scalar_lea.vmem %s0, 92
    %v381 = vld [vmem:[%s380] sm:$0x1]
    %382 = vrot.lane.b32.xlu0 %v381, 76
    %v383 = vpop.permute.xlu0 %382
    %vm384 = vcmask 663136
    %s385 = scalar_lea.vmem [#allocation0], 24
    %386 = vst.msk [vmem:[%s385] sm:$0x1] %vm384, %v383
    %s387 = scalar_lea.vmem %s0, 15
    %v388 = vld [vmem:[%s387] sm:$0x1]
    %389 = vrot.lane.b32.xlu0 %v388, 75
    %v390 = vpop.permute.xlu0 %389
    %vm391 = vcmask 654936
    %392 = vst.msk [vmem:[#allocation0] sm:$0x1] %vm391, %v390
    %s393 = scalar_lea.vmem %s0, 66
    %v394 = vld [vmem:[%s393] sm:$0x1]
    %395 = vrot.lane.b32.xlu0 %v394, 74
    %v396 = vpop.permute.xlu0 %395
    %vm397 = vcmask 646736
    %s398 = scalar_lea.vmem [#allocation0], 16
    %399 = vst.msk [vmem:[%s398] sm:$0x1] %vm397, %v396
    %s400 = scalar_lea.vmem %s0, 117
    %v401 = vld [vmem:[%s400] sm:$0x1]
    %402 = vrot.lane.b32.xlu0 %v401, 73
    %v403 = vpop.permute.xlu0 %402
    %vm404 = vcmask 638536
    %s405 = scalar_lea.vmem [#allocation0], 32
    %406 = vst.msk [vmem:[%s405] sm:$0x1] %vm404, %v403
    %s407 = scalar_lea.vmem %s0, 40
    %v408 = vld [vmem:[%s407] sm:$0x1]
    %409 = vrot.lane.b32.xlu0 %v408, 72
    %v410 = vpop.permute.xlu0 %409
    %vm411 = vcmask 630336
    %s412 = scalar_lea.vmem [#allocation0], 8
    %413 = vst.msk [vmem:[%s412] sm:$0x1] %vm411, %v410
    %s414 = scalar_lea.vmem %s0, 91
    %v415 = vld [vmem:[%s414] sm:$0x1]
    %416 = vrot.lane.b32.xlu0 %v415, 71
    %v417 = vpop.permute.xlu0 %416
    %vm418 = vcmask 622136
    %s419 = scalar_lea.vmem [#allocation0], 24
    %420 = vst.msk [vmem:[%s419] sm:$0x1] %vm418, %v417
    %s421 = scalar_lea.vmem %s0, 14
    %v422 = vld [vmem:[%s421] sm:$0x1]
    %423 = vrot.lane.b32.xlu0 %v422, 70
    %v424 = vpop.permute.xlu0 %423
    %vm425 = vcmask 613936
    %426 = vst.msk [vmem:[#allocation0] sm:$0x1] %vm425, %v424
    %s427 = scalar_lea.vmem %s0, 65
    %v428 = vld [vmem:[%s427] sm:$0x1]
    %429 = vrot.lane.b32.xlu0 %v428, 69
    %v430 = vpop.permute.xlu0 %429
    %vm431 = vcmask 605736
    %s432 = scalar_lea.vmem [#allocation0], 16
    %433 = vst.msk [vmem:[%s432] sm:$0x1] %vm431, %v430
    %s434 = scalar_lea.vmem %s0, 116
    %v435 = vld [vmem:[%s434] sm:$0x1]
    %436 = vrot.lane.b32.xlu0 %v435, 68
    %v437 = vpop.permute.xlu0 %436
    %vm438 = vcmask 597536
    %s439 = scalar_lea.vmem [#allocation0], 32
    %440 = vst.msk [vmem:[%s439] sm:$0x1] %vm438, %v437
    %s441 = scalar_lea.vmem %s0, 39
    %v442 = vld [vmem:[%s441] sm:$0x1]
    %443 = vrot.lane.b32.xlu0 %v442, 67
    %v444 = vpop.permute.xlu0 %443
    %vm445 = vcmask 589336
    %s446 = scalar_lea.vmem [#allocation0], 8
    %447 = vst.msk [vmem:[%s446] sm:$0x1] %vm445, %v444
    %s448 = scalar_lea.vmem %s0, 90
    %v449 = vld [vmem:[%s448] sm:$0x1]
    %450 = vrot.lane.b32.xlu0 %v449, 66
    %v451 = vpop.permute.xlu0 %450
    %vm452 = vcmask 581136
    %s453 = scalar_lea.vmem [#allocation0], 24
    %454 = vst.msk [vmem:[%s453] sm:$0x1] %vm452, %v451
    %s455 = scalar_lea.vmem %s0, 13
    %v456 = vld [vmem:[%s455] sm:$0x1]
    %457 = vrot.lane.b32.xlu0 %v456, 65
    %v458 = vpop.permute.xlu0 %457
    %vm459 = vcmask 572936
    %460 = vst.msk [vmem:[#allocation0] sm:$0x1] %vm459, %v458
    %s461 = scalar_lea.vmem %s0, 64
    %v462 = vld [vmem:[%s461] sm:$0x1]
    %463 = vrot.lane.b32.xlu0 %v462, 64
    %v464 = vpop.permute.xlu0 %463
    %vm465 = vcmask 564736
    %s466 = scalar_lea.vmem [#allocation0], 16
    %467 = vst.msk [vmem:[%s466] sm:$0x1] %vm465, %v464
    %s468 = scalar_lea.vmem %s0, 115
    %v469 = vld [vmem:[%s468] sm:$0x1]
    %470 = vrot.lane.b32.xlu0 %v469, 63
    %v471 = vpop.permute.xlu0 %470
    %vm472 = vcmask 556536
    %s473 = scalar_lea.vmem [#allocation0], 32
    %474 = vst.msk [vmem:[%s473] sm:$0x1] %vm472, %v471
    %s475 = scalar_lea.vmem %s0, 38
    %v476 = vld [vmem:[%s475] sm:$0x1]
    %477 = vrot.lane.b32.xlu0 %v476, 62
    %v478 = vpop.permute.xlu0 %477
    %vm479 = vcmask 548336
    %s480 = scalar_lea.vmem [#allocation0], 8
    %481 = vst.msk [vmem:[%s480] sm:$0x1] %vm479, %v478
    %s482 = scalar_lea.vmem %s0, 89
    %v483 = vld [vmem:[%s482] sm:$0x1]
    %484 = vrot.lane.b32.xlu0 %v483, 61
    %v485 = vpop.permute.xlu0 %484
    %vm486 = vcmask 540136
    %s487 = scalar_lea.vmem [#allocation0], 24
    %488 = vst.msk [vmem:[%s487] sm:$0x1] %vm486, %v485
    %s489 = scalar_lea.vmem %s0, 12
    %v490 = vld [vmem:[%s489] sm:$0x1]
    %491 = vrot.lane.b32.xlu0 %v490, 60
    %v492 = vpop.permute.xlu0 %491
    %vm493 = vcmask 531936
    %494 = vst.msk [vmem:[#allocation0] sm:$0x1] %vm493, %v492
    %s495 = scalar_lea.vmem %s0, 63
    %v496 = vld [vmem:[%s495] sm:$0x1]
    %497 = vrot.lane.b32.xlu0 %v496, 59
    %v498 = vpop.permute.xlu0 %497
    %vm499 = vcmask 523736
    %s500 = scalar_lea.vmem [#allocation0], 16
    %501 = vst.msk [vmem:[%s500] sm:$0x1] %vm499, %v498
    %s502 = scalar_lea.vmem %s0, 114
    %v503 = vld [vmem:[%s502] sm:$0x1]
    %504 = vrot.lane.b32.xlu0 %v503, 58
    %v505 = vpop.permute.xlu0 %504
    %vm506 = vcmask 515536
    %s507 = scalar_lea.vmem [#allocation0], 32
    %508 = vst.msk [vmem:[%s507] sm:$0x1] %vm506, %v505
    %s509 = scalar_lea.vmem %s0, 37
    %v510 = vld [vmem:[%s509] sm:$0x1]
    %511 = vrot.lane.b32.xlu0 %v510, 57
    %v512 = vpop.permute.xlu0 %511
    %vm513 = vcmask 507336
    %s514 = scalar_lea.vmem [#allocation0], 8
    %515 = vst.msk [vmem:[%s514] sm:$0x1] %vm513, %v512
    %s516 = scalar_lea.vmem %s0, 88
    %v517 = vld [vmem:[%s516] sm:$0x1]
    %518 = vrot.lane.b32.xlu0 %v517, 56
    %v519 = vpop.permute.xlu0 %518
    %vm520 = vcmask 499136
    %s521 = scalar_lea.vmem [#allocation0], 24
    %522 = vst.msk [vmem:[%s521] sm:$0x1] %vm520, %v519
    %s523 = scalar_lea.vmem %s0, 11
    %v524 = vld [vmem:[%s523] sm:$0x1]
    %525 = vrot.lane.b32.xlu0 %v524, 55
    %v526 = vpop.permute.xlu0 %525
    %vm527 = vcmask 490936
    %528 = vst.msk [vmem:[#allocation0] sm:$0x1] %vm527, %v526
    %s529 = scalar_lea.vmem %s0, 62
    %v530 = vld [vmem:[%s529] sm:$0x1]
    %531 = vrot.lane.b32.xlu0 %v530, 54
    %v532 = vpop.permute.xlu0 %531
    %vm533 = vcmask 482736
    %s534 = scalar_lea.vmem [#allocation0], 16
    %535 = vst.msk [vmem:[%s534] sm:$0x1] %vm533, %v532
    %s536 = scalar_lea.vmem %s0, 113
    %v537 = vld [vmem:[%s536] sm:$0x1]
    %538 = vrot.lane.b32.xlu0 %v537, 53
    %v539 = vpop.permute.xlu0 %538
    %vm540 = vcmask 474536
    %s541 = scalar_lea.vmem [#allocation0], 32
    %542 = vst.msk [vmem:[%s541] sm:$0x1] %vm540, %v539
    %s543 = scalar_lea.vmem %s0, 36
    %v544 = vld [vmem:[%s543] sm:$0x1]
    %545 = vrot.lane.b32.xlu0 %v544, 52
    %v546 = vpop.permute.xlu0 %545
    %vm547 = vcmask 466336
    %s548 = scalar_lea.vmem [#allocation0], 8
    %549 = vst.msk [vmem:[%s548] sm:$0x1] %vm547, %v546
    %s550 = scalar_lea.vmem %s0, 87
    %v551 = vld [vmem:[%s550] sm:$0x1]
    %552 = vrot.lane.b32.xlu0 %v551, 51
    %v553 = vpop.permute.xlu0 %552
    %vm554 = vcmask 458136
    %s555 = scalar_lea.vmem [#allocation0], 24
    %556 = vst.msk [vmem:[%s555] sm:$0x1] %vm554, %v553
    %s557 = scalar_lea.vmem %s0, 10
    %v558 = vld [vmem:[%s557] sm:$0x1]
    %559 = vrot.lane.b32.xlu0 %v558, 50
    %v560 = vpop.permute.xlu0 %559
    %vm561 = vcmask 449936
    %562 = vst.msk [vmem:[#allocation0] sm:$0x1] %vm561, %v560
    %s563 = scalar_lea.vmem %s0, 61
    %v564 = vld [vmem:[%s563] sm:$0x1]
    %565 = vrot.lane.b32.xlu0 %v564, 49
    %v566 = vpop.permute.xlu0 %565
    %vm567 = vcmask 441736
    %s568 = scalar_lea.vmem [#allocation0], 16
    %569 = vst.msk [vmem:[%s568] sm:$0x1] %vm567, %v566
    %s570 = scalar_lea.vmem %s0, 112
    %v571 = vld [vmem:[%s570] sm:$0x1]
    %572 = vrot.lane.b32.xlu0 %v571, 48
    %v573 = vpop.permute.xlu0 %572
    %vm574 = vcmask 433536
    %s575 = scalar_lea.vmem [#allocation0], 32
    %576 = vst.msk [vmem:[%s575] sm:$0x1] %vm574, %v573
    %s577 = scalar_lea.vmem %s0, 35
    %v578 = vld [vmem:[%s577] sm:$0x1]
    %579 = vrot.lane.b32.xlu0 %v578, 47
    %v580 = vpop.permute.xlu0 %579
    %vm581 = vcmask 425336
    %s582 = scalar_lea.vmem [#allocation0], 8
    %583 = vst.msk [vmem:[%s582] sm:$0x1] %vm581, %v580
    %s584 = scalar_lea.vmem %s0, 86
    %v585 = vld [vmem:[%s584] sm:$0x1]
    %586 = vrot.lane.b32.xlu0 %v585, 46
    %v587 = vpop.permute.xlu0 %586
    %vm588 = vcmask 417136
    %s589 = scalar_lea.vmem [#allocation0], 24
    %590 = vst.msk [vmem:[%s589] sm:$0x1] %vm588, %v587
    %s591 = scalar_lea.vmem %s0, 9
    %v592 = vld [vmem:[%s591] sm:$0x1]
    %593 = vrot.lane.b32.xlu0 %v592, 45
    %v594 = vpop.permute.xlu0 %593
    %vm595 = vcmask 408936
    %596 = vst.msk [vmem:[#allocation0] sm:$0x1] %vm595, %v594
    %s597 = scalar_lea.vmem %s0, 60
    %v598 = vld [vmem:[%s597] sm:$0x1]
    %599 = vrot.lane.b32.xlu0 %v598, 44
    %v600 = vpop.permute.xlu0 %599
    %vm601 = vcmask 400736
    %s602 = scalar_lea.vmem [#allocation0], 16
    %603 = vst.msk [vmem:[%s602] sm:$0x1] %vm601, %v600
    %s604 = scalar_lea.vmem %s0, 111
    %v605 = vld [vmem:[%s604] sm:$0x1]
    %606 = vrot.lane.b32.xlu0 %v605, 43
    %v607 = vpop.permute.xlu0 %606
    %vm608 = vcmask 392536
    %s609 = scalar_lea.vmem [#allocation0], 32
    %610 = vst.msk [vmem:[%s609] sm:$0x1] %vm608, %v607
    %s611 = scalar_lea.vmem %s0, 34
    %v612 = vld [vmem:[%s611] sm:$0x1]
    %613 = vrot.lane.b32.xlu0 %v612, 42
    %v614 = vpop.permute.xlu0 %613
    %vm615 = vcmask 384336
    %s616 = scalar_lea.vmem [#allocation0], 8
    %617 = vst.msk [vmem:[%s616] sm:$0x1] %vm615, %v614
    %s618 = scalar_lea.vmem %s0, 85
    %v619 = vld [vmem:[%s618] sm:$0x1]
    %620 = vrot.lane.b32.xlu0 %v619, 41
    %v621 = vpop.permute.xlu0 %620
    %vm622 = vcmask 376136
    %s623 = scalar_lea.vmem [#allocation0], 24
    %624 = vst.msk [vmem:[%s623] sm:$0x1] %vm622, %v621
    %s625 = scalar_lea.vmem %s0, 8
    %v626 = vld [vmem:[%s625] sm:$0x1]
    %627 = vrot.lane.b32.xlu0 %v626, 40
    %v628 = vpop.permute.xlu0 %627
    %vm629 = vcmask 367936
    %630 = vst.msk [vmem:[#allocation0] sm:$0x1] %vm629, %v628
    %s631 = scalar_lea.vmem %s0, 59
    %v632 = vld [vmem:[%s631] sm:$0x1]
    %633 = vrot.lane.b32.xlu0 %v632, 39
    %v634 = vpop.permute.xlu0 %633
    %vm635 = vcmask 359736
    %s636 = scalar_lea.vmem [#allocation0], 16
    %637 = vst.msk [vmem:[%s636] sm:$0x1] %vm635, %v634
    %s638 = scalar_lea.vmem %s0, 110
    %v639 = vld [vmem:[%s638] sm:$0x1]
    %640 = vrot.lane.b32.xlu0 %v639, 38
    %v641 = vpop.permute.xlu0 %640
    %vm642 = vcmask 351536
    %s643 = scalar_lea.vmem [#allocation0], 32
    %644 = vst.msk [vmem:[%s643] sm:$0x1] %vm642, %v641
    %s645 = scalar_lea.vmem %s0, 33
    %v646 = vld [vmem:[%s645] sm:$0x1]
    %647 = vrot.lane.b32.xlu0 %v646, 37
    %v648 = vpop.permute.xlu0 %647
    %vm649 = vcmask 343336
    %s650 = scalar_lea.vmem [#allocation0], 8
    %651 = vst.msk [vmem:[%s650] sm:$0x1] %vm649, %v648
    %s652 = scalar_lea.vmem %s0, 84
    %v653 = vld [vmem:[%s652] sm:$0x1]
    %654 = vrot.lane.b32.xlu0 %v653, 36
    %v655 = vpop.permute.xlu0 %654
    %vm656 = vcmask 335136
    %s657 = scalar_lea.vmem [#allocation0], 24
    %658 = vst.msk [vmem:[%s657] sm:$0x1] %vm656, %v655
    %s659 = scalar_lea.vmem %s0, 7
    %v660 = vld [vmem:[%s659] sm:$0x1]
    %661 = vrot.lane.b32.xlu0 %v660, 35
    %v662 = vpop.permute.xlu0 %661
    %vm663 = vcmask 326936
    %664 = vst.msk [vmem:[#allocation0] sm:$0x1] %vm663, %v662
    %s665 = scalar_lea.vmem %s0, 58
    %v666 = vld [vmem:[%s665] sm:$0x1]
    %667 = vrot.lane.b32.xlu0 %v666, 34
    %v668 = vpop.permute.xlu0 %667
    %vm669 = vcmask 318736
    %s670 = scalar_lea.vmem [#allocation0], 16
    %671 = vst.msk [vmem:[%s670] sm:$0x1] %vm669, %v668
    %s672 = scalar_lea.vmem %s0, 109
    %v673 = vld [vmem:[%s672] sm:$0x1]
    %674 = vrot.lane.b32.xlu0 %v673, 33
    %v675 = vpop.permute.xlu0 %674
    %vm676 = vcmask 310536
    %s677 = scalar_lea.vmem [#allocation0], 32
    %678 = vst.msk [vmem:[%s677] sm:$0x1] %vm676, %v675
    %s679 = scalar_lea.vmem %s0, 32
    %v680 = vld [vmem:[%s679] sm:$0x1]
    %681 = vrot.lane.b32.xlu0 %v680, 32
    %v682 = vpop.permute.xlu0 %681
    %vm683 = vcmask 302336
    %s684 = scalar_lea.vmem [#allocation0], 8
    %685 = vst.msk [vmem:[%s684] sm:$0x1] %vm683, %v682
    %s686 = scalar_lea.vmem %s0, 83
    %v687 = vld [vmem:[%s686] sm:$0x1]
    %688 = vrot.lane.b32.xlu0 %v687, 31
    %v689 = vpop.permute.xlu0 %688
    %vm690 = vcmask 294136
    %s691 = scalar_lea.vmem [#allocation0], 24
    %692 = vst.msk [vmem:[%s691] sm:$0x1] %vm690, %v689
    %s693 = scalar_lea.vmem %s0, 6
    %v694 = vld [vmem:[%s693] sm:$0x1]
    %695 = vrot.lane.b32.xlu0 %v694, 30
    %v696 = vpop.permute.xlu0 %695
    %vm697 = vcmask 285936
    %698 = vst.msk [vmem:[#allocation0] sm:$0x1] %vm697, %v696
    %s699 = scalar_lea.vmem %s0, 57
    %v700 = vld [vmem:[%s699] sm:$0x1]
    %701 = vrot.lane.b32.xlu0 %v700, 29
    %v702 = vpop.permute.xlu0 %701
    %vm703 = vcmask 277736
    %s704 = scalar_lea.vmem [#allocation0], 16
    %705 = vst.msk [vmem:[%s704] sm:$0x1] %vm703, %v702
    %s706 = scalar_lea.vmem %s0, 108
    %v707 = vld [vmem:[%s706] sm:$0x1]
    %708 = vrot.lane.b32.xlu0 %v707, 28
    %v709 = vpop.permute.xlu0 %708
    %vm710 = vcmask 269536
    %s711 = scalar_lea.vmem [#allocation0], 32
    %712 = vst.msk [vmem:[%s711] sm:$0x1] %vm710, %v709
    %s713 = scalar_lea.vmem %s0, 31
    %v714 = vld [vmem:[%s713] sm:$0x1]
    %715 = vrot.lane.b32.xlu0 %v714, 27
    %v716 = vpop.permute.xlu0 %715
    %vm717 = vcmask 261336
    %s718 = scalar_lea.vmem [#allocation0], 8
    %719 = vst.msk [vmem:[%s718] sm:$0x1] %vm717, %v716
    %s720 = scalar_lea.vmem %s0, 82
    %v721 = vld [vmem:[%s720] sm:$0x1]
    %722 = vrot.lane.b32.xlu0 %v721, 26
    %v723 = vpop.permute.xlu0 %722
    %vm724 = vcmask 253136
    %s725 = scalar_lea.vmem [#allocation0], 24
    %726 = vst.msk [vmem:[%s725] sm:$0x1] %vm724, %v723
    %s727 = scalar_lea.vmem %s0, 5
    %v728 = vld [vmem:[%s727] sm:$0x1]
    %729 = vrot.lane.b32.xlu0 %v728, 25
    %v730 = vpop.permute.xlu0 %729
    %vm731 = vcmask 244936
    %732 = vst.msk [vmem:[#allocation0] sm:$0x1] %vm731, %v730
    %s733 = scalar_lea.vmem %s0, 56
    %v734 = vld [vmem:[%s733] sm:$0x1]
    %735 = vrot.lane.b32.xlu0 %v734, 24
    %v736 = vpop.permute.xlu0 %735
    %vm737 = vcmask 236736
    %s738 = scalar_lea.vmem [#allocation0], 16
    %739 = vst.msk [vmem:[%s738] sm:$0x1] %vm737, %v736
    %s740 = scalar_lea.vmem %s0, 107
    %v741 = vld [vmem:[%s740] sm:$0x1]
    %742 = vrot.lane.b32.xlu0 %v741, 23
    %v743 = vpop.permute.xlu0 %742
    %vm744 = vcmask 228536
    %s745 = scalar_lea.vmem [#allocation0], 32
    %746 = vst.msk [vmem:[%s745] sm:$0x1] %vm744, %v743
    %s747 = scalar_lea.vmem %s0, 30
    %v748 = vld [vmem:[%s747] sm:$0x1]
    %749 = vrot.lane.b32.xlu0 %v748, 22
    %v750 = vpop.permute.xlu0 %749
    %vm751 = vcmask 220336
    %s752 = scalar_lea.vmem [#allocation0], 8
    %753 = vst.msk [vmem:[%s752] sm:$0x1] %vm751, %v750
    %s754 = scalar_lea.vmem %s0, 81
    %v755 = vld [vmem:[%s754] sm:$0x1]
    %756 = vrot.lane.b32.xlu0 %v755, 21
    %v757 = vpop.permute.xlu0 %756
    %vm758 = vcmask 212136
    %s759 = scalar_lea.vmem [#allocation0], 24
    %760 = vst.msk [vmem:[%s759] sm:$0x1] %vm758, %v757
    %s761 = scalar_lea.vmem %s0, 4
    %v762 = vld [vmem:[%s761] sm:$0x1]
    %763 = vrot.lane.b32.xlu0 %v762, 20
    %v764 = vpop.permute.xlu0 %763
    %vm765 = vcmask 203936
    %766 = vst.msk [vmem:[#allocation0] sm:$0x1] %vm765, %v764
    %s767 = scalar_lea.vmem %s0, 55
    %v768 = vld [vmem:[%s767] sm:$0x1]
    %769 = vrot.lane.b32.xlu0 %v768, 19
    %v770 = vpop.permute.xlu0 %769
    %vm771 = vcmask 195736
    %s772 = scalar_lea.vmem [#allocation0], 16
    %773 = vst.msk [vmem:[%s772] sm:$0x1] %vm771, %v770
    %s774 = scalar_lea.vmem %s0, 106
    %v775 = vld [vmem:[%s774] sm:$0x1]
    %776 = vrot.lane.b32.xlu0 %v775, 18
    %v777 = vpop.permute.xlu0 %776
    %vm778 = vcmask 187536
    %s779 = scalar_lea.vmem [#allocation0], 32
    %780 = vst.msk [vmem:[%s779] sm:$0x1] %vm778, %v777
    %s781 = scalar_lea.vmem %s0, 29
    %v782 = vld [vmem:[%s781] sm:$0x1]
    %783 = vrot.lane.b32.xlu0 %v782, 17
    %v784 = vpop.permute.xlu0 %783
    %vm785 = vcmask 179336
    %s786 = scalar_lea.vmem [#allocation0], 8
    %787 = vst.msk [vmem:[%s786] sm:$0x1] %vm785, %v784
    %s788 = scalar_lea.vmem %s0, 80
    %v789 = vld [vmem:[%s788] sm:$0x1]
    %790 = vrot.lane.b32.xlu0 %v789, 16
    %v791 = vpop.permute.xlu0 %790
    %vm792 = vcmask 171136
    %s793 = scalar_lea.vmem [#allocation0], 24
    %794 = vst.msk [vmem:[%s793] sm:$0x1] %vm792, %v791
    %s795 = scalar_lea.vmem %s0, 3
    %v796 = vld [vmem:[%s795] sm:$0x1]
    %797 = vrot.lane.b32.xlu0 %v796, 15
    %v798 = vpop.permute.xlu0 %797
    %vm799 = vcmask 162936
    %800 = vst.msk [vmem:[#allocation0] sm:$0x1] %vm799, %v798
    %s801 = scalar_lea.vmem %s0, 54
    %v802 = vld [vmem:[%s801] sm:$0x1]
    %803 = vrot.lane.b32.xlu0 %v802, 14
    %v804 = vpop.permute.xlu0 %803
    %vm805 = vcmask 154736
    %s806 = scalar_lea.vmem [#allocation0], 16
    %807 = vst.msk [vmem:[%s806] sm:$0x1] %vm805, %v804
    %s808 = scalar_lea.vmem %s0, 105
    %v809 = vld [vmem:[%s808] sm:$0x1]
    %810 = vrot.lane.b32.xlu0 %v809, 13
    %v811 = vpop.permute.xlu0 %810
    %vm812 = vcmask 146536
    %s813 = scalar_lea.vmem [#allocation0], 32
    %814 = vst.msk [vmem:[%s813] sm:$0x1] %vm812, %v811
    %s815 = scalar_lea.vmem %s0, 28
    %v816 = vld [vmem:[%s815] sm:$0x1]
    %817 = vrot.lane.b32.xlu0 %v816, 12
    %v818 = vpop.permute.xlu0 %817
    %vm819 = vcmask 138336
    %s820 = scalar_lea.vmem [#allocation0], 8
    %821 = vst.msk [vmem:[%s820] sm:$0x1] %vm819, %v818
    %s822 = scalar_lea.vmem %s0, 79
    %v823 = vld [vmem:[%s822] sm:$0x1]
    %824 = vrot.lane.b32.xlu0 %v823, 11
    %v825 = vpop.permute.xlu0 %824
    %vm826 = vcmask 130136
    %s827 = scalar_lea.vmem [#allocation0], 24
    %828 = vst.msk [vmem:[%s827] sm:$0x1] %vm826, %v825
    %s829 = scalar_lea.vmem %s0, 2
    %v830 = vld [vmem:[%s829] sm:$0x1]
    %831 = vrot.lane.b32.xlu0 %v830, 10
    %v832 = vpop.permute.xlu0 %831
    %vm833 = vcmask 121936
    %834 = vst.msk [vmem:[#allocation0] sm:$0x1] %vm833, %v832
    %s835 = scalar_lea.vmem %s0, 53
    %v836 = vld [vmem:[%s835] sm:$0x1]
    %837 = vrot.lane.b32.xlu0 %v836, 9
    %v838 = vpop.permute.xlu0 %837
    %vm839 = vcmask 113736
    %s840 = scalar_lea.vmem [#allocation0], 16
    %841 = vst.msk [vmem:[%s840] sm:$0x1] %vm839, %v838
    %s842 = scalar_lea.vmem %s0, 104
    %v843 = vld [vmem:[%s842] sm:$0x1]
    %844 = vrot.lane.b32.xlu0 %v843, 8
    %v845 = vpop.permute.xlu0 %844
    %vm846 = vcmask 105536
    %s847 = scalar_lea.vmem [#allocation0], 32
    %848 = vst.msk [vmem:[%s847] sm:$0x1] %vm846, %v845
    %s849 = scalar_lea.vmem %s0, 27
    %v850 = vld [vmem:[%s849] sm:$0x1]
    %851 = vrot.lane.b32.xlu0 %v850, 7
    %v852 = vpop.permute.xlu0 %851
    %vm853 = vcmask 97336
    %s854 = scalar_lea.vmem [#allocation0], 8
    %855 = vst.msk [vmem:[%s854] sm:$0x1] %vm853, %v852
    %s856 = scalar_lea.vmem %s0, 78
    %v857 = vld [vmem:[%s856] sm:$0x1]
    %858 = vrot.lane.b32.xlu0 %v857, 6
    %v859 = vpop.permute.xlu0 %858
    %vm860 = vcmask 89136
    %s861 = scalar_lea.vmem [#allocation0], 24
    %862 = vst.msk [vmem:[%s861] sm:$0x1] %vm860, %v859
    %s863 = scalar_lea.vmem %s0, 1
    %v864 = vld [vmem:[%s863] sm:$0x1]
    %865 = vrot.lane.b32.xlu0 %v864, 5
    %v866 = vpop.permute.xlu0 %865
    %vm867 = vcmask 80936
    %868 = vst.msk [vmem:[#allocation0] sm:$0x1] %vm867, %v866
    %s869 = scalar_lea.vmem %s0, 52
    %v870 = vld [vmem:[%s869] sm:$0x1]
    %871 = vrot.lane.b32.xlu0 %v870, 4
    %v872 = vpop.permute.xlu0 %871
    %vm873 = vcmask 72736
    %s874 = scalar_lea.vmem [#allocation0], 16
    %875 = vst.msk [vmem:[%s874] sm:$0x1] %vm873, %v872
    %s876 = scalar_lea.vmem %s0, 103
    %v877 = vld [vmem:[%s876] sm:$0x1]
    %878 = vrot.lane.b32.xlu0 %v877, 3
    %v879 = vpop.permute.xlu0 %878
    %vm880 = vcmask 64536
    %s881 = scalar_lea.vmem [#allocation0], 32
    %882 = vst.msk [vmem:[%s881] sm:$0x1] %vm880, %v879
    %s883 = scalar_lea.vmem %s0, 26
    %v884 = vld [vmem:[%s883] sm:$0x1]
    %885 = vrot.lane.b32.xlu0 %v884, 2
    %v886 = vpop.permute.xlu0 %885
    %vm887 = vcmask 56336
    %s888 = scalar_lea.vmem [#allocation0], 8
    %889 = vst.msk [vmem:[%s888] sm:$0x1] %vm887, %v886
    %s890 = scalar_lea.vmem %s0, 77
    %v891 = vld [vmem:[%s890] sm:$0x1]
    %892 = vrot.lane.b32.xlu0 %v891, 1
    %v893 = vpop.permute.xlu0 %892
    %vm894 = vcmask 48136
    %s895 = scalar_lea.vmem [#allocation0], 24
    %896 = vst.msk [vmem:[%s895] sm:$0x1] %vm894, %v893
    %s898 = ssub.s32 2, 1
    %v899 = vld [vmem:[#allocation0] sm:%s898]
    %s901 = ssub.s32 2, 1
    %902 = vst [vmem:[%s1] sm:%s901] %v899
    %s903 = scalar_lea.vmem [#allocation0], 8
    %v904 = vld [vmem:[%s903] sm:%s898]
    %s906 = ssub.s32 2, 1
    %s907 = scalar_lea.vmem %s1, 1
    %908 = vst [vmem:[%s907] sm:%s906] %v904
    %s909 = scalar_lea.vmem [#allocation0], 16
    %v910 = vld [vmem:[%s909] sm:%s898]
    %s912 = ssub.s32 2, 1
    %s913 = scalar_lea.vmem %s1, 2
    %914 = vst [vmem:[%s913] sm:%s912] %v910
    %s915 = scalar_lea.vmem [#allocation0], 24
    %v916 = vld [vmem:[%s915] sm:%s898]
    %s918 = ssub.s32 2, 1
    %s919 = scalar_lea.vmem %s1, 3
    %920 = vst [vmem:[%s919] sm:%s918] %v916
    %s921 = scalar_lea.vmem [#allocation0], 32
    %v922 = vld [vmem:[%s921] sm:%s898]
    %s924 = ssub.s32 2, 1
    %s925 = scalar_lea.vmem %s1, 4
    %926 = vst [vmem:[%s925] sm:%s924] %v922

// kernel: my_loss.1
$region0: #{my_loss.1}
  #allocation0 [shape = 'u32[]', space=smem, size = 0x4, offset = 0x4, fixed_abs, tag = 'smem constant byte address 0x4 - core index']
  #allocation1 [shape = 'u32[72,128]{1,0:T(1,128)}', space=vmem, size = 0x9000, scoped, tag = 'internal scratch']
  #allocation2 [shape = 'f32[1,640]{1,0:T(1,128)}', space=vmem, size = 0xa00, scoped, tag = 'scratch operand']
  %s0 = inlined_call_operand.vmem [shape: f32[8,640], index: 0, kind: input, shape index: {}]
  %s1 = inlined_call_operand.vmem [shape: f32[8,640], index: 1, kind: input, shape index: {}]
  %s2 = inlined_call_operand.vmem [shape: f32[1,640], index: 2, kind: input, shape index: {}]
  %s3 = inlined_call_operand.hbm [shape: f32[1,1], index: 3, kind: output, shape index: {}]
  %s4 = sld [smem:[#allocation0]]
  $region38: #{my_loss.1} parent=0
    _
  %s6 = ssub.s32 1, %s4
  %s7 = scalar_select 0, %s6, %s4
  $region1: #{my_loss.1} parent=0
    #allocation3 [shape = 'u8[512]{0}', space=smem, size = 0x200, scoped, tag = 'output window, operand 0, single buffered']
    #allocation4 [shape = 's32[1]{0}', space=sflag, size = 0x4, scoped, tag = 'scoped memory for my_loss.1']
    %8 = vsyncpa [#allocation4], 0
    // Predicated region
    $region2: #{my_loss.1} parent=1 // pred_check
      _
    $region3: #{my_loss.1} parent=1 // pred_check_branch
      %10 = sbr.rel (0) target = $region5
    $region4: #{my_loss.1} parent=1 // pred_region
      %s11 = sadd.s32 0, 0
      %p12 = scmp.lt.s32.totalorder %s11, 0
      %s13 = scalar_select %p12, %s11, 0
      %s14 = smul.addr %s13, 5
      %s15 = smul.addr %s14, 8
      %s16 = scalar_lea.vmem %s0, %s15
      %s17 = sadd.s32 0, 0
    $region5: #{my_loss.1} parent=1 // pred_fallthru
      _
    // Predicated region
    $region6: #{my_loss.1} parent=1 // pred_check
      _
    $region7: #{my_loss.1} parent=1 // pred_check_branch
      %19 = sbr.rel (0) target = $region9
    $region8: #{my_loss.1} parent=1 // pred_region
      %s20 = sadd.s32 0, 0
      %p21 = scmp.lt.s32.totalorder %s20, 0
      %s22 = scalar_select %p21, %s20, 0
      %s23 = smul.addr %s22, 5
      %s24 = smul.addr %s23, 8
      %s25 = scalar_lea.vmem %s1, %s24
      %s26 = sadd.s32 0, 0
    $region9: #{my_loss.1} parent=1 // pred_fallthru
      _
    // Predicated region
    $region10: #{my_loss.1} parent=1 // pred_check
      _
    $region11: #{my_loss.1} parent=1 // pred_check_branch
      %28 = sbr.rel (0) target = $region13
    $region12: #{my_loss.1} parent=1 // pred_region
      _
    $region13: #{my_loss.1} parent=1 // pred_fallthru
      _
    %s29 = sadd.s32 0, 0
    %p30 = scmp.lt.s32.totalorder %s29, 0
    %s31 = scalar_select %p30, %s29, 0
    %s32 = smul.addr %s31, 5
    %s33 = smul.addr %s32, 8
    %s34 = scalar_lea.vmem %s0, %s33
    %s35 = sadd.s32 0, 0
    %p36 = scmp.lt.s32.totalorder %s35, 0
    %s37 = scalar_select %p36, %s35, 0
    %s38 = smul.addr %s37, 5
    %s39 = smul.addr %s38, 8
    %s40 = scalar_lea.vmem %s1, %s39
    %s41 = sadd.s32 0, 0
    %p42 = scmp.lt.s32.totalorder %s41, 0
    %s43 = scalar_select %p42, %s41, 0
    %s44 = smul.addr %s43, 5
    %s45 = smul.addr %s44, 8
    %s46 = scalar_lea.vmem %s0, %s45
    %s47 = sadd.s32 0, 0
    %s48 = sadd.s32 0, 0
    %p49 = scmp.lt.s32.totalorder %s48, 0
    %s50 = scalar_select %p49, %s48, 0
    %s51 = smul.addr %s50, 5
    %s52 = smul.addr %s51, 8
    %s53 = scalar_lea.vmem %s1, %s52
    %s54 = sadd.s32 0, 0
    %s55 = sadd.s32 0, 0
    %p56 = scmp.eq.s32.totalorder 0, 0
    // Predicated region
    $region14: #{my_loss.1} parent=1 // pred_check
      %p57 = pneg %p56
    $region15: #{my_loss.1} parent=1 // pred_check_branch
      %59 = sbr.rel (%p57) target = $region17
    $region16: #{my_loss.1} parent=1 // pred_region
      %v60 = vlaneseq
      %vm61 = vcmp.ge.s32.totalorder %v60, 0
      %vm62 = vcmp.lt.s32.totalorder %v60, 640
      %vm63 = vmand %vm61, %vm62
      %64 = vst.msk [vmem:[#allocation2] sm:$0x1f] %vm63, 0.0
    $region17: #{my_loss.1} parent=1 // pred_fallthru
      _
    %v65 = vld [vmem:[%s46] sm:$0xff]
    %v66 = vld [vmem:[%s46 + $0x8] sm:$0xff]
    %v67 = vld [vmem:[%s46 + $0x10] sm:$0xff]
    %v68 = vld [vmem:[%s46 + $0x18] sm:$0xff]
    %v69 = vld [vmem:[%s46 + $0x20] sm:$0xff]
    %v70 = vld [vmem:[%s53] sm:$0xff]
    %v71 = vld [vmem:[%s53 + $0x8] sm:$0xff]
    %v72 = vld [vmem:[%s53 + $0x10] sm:$0xff]
    %v73 = vld [vmem:[%s53 + $0x18] sm:$0xff]
    %v74 = vld [vmem:[%s53 + $0x20] sm:$0xff]
    %v75 = vld [vmem:[%s2] sm:$0x1f]
    %v76 = vand.u32 2147483647, %v65
    %v77 = vand.u32 2147483647, %v66
    %v78 = vand.u32 2147483647, %v67
    %v79 = vand.u32 2147483647, %v68
    %v80 = vand.u32 2147483647, %v69
    %v81 = vsub.f32 0.0, %v76
    %v82 = vsub.f32 0.0, %v77
    %v83 = vsub.f32 0.0, %v78
    %v84 = vsub.f32 0.0, %v79
    %v85 = vsub.f32 0.0, %v80
    %v86 = vmul.f32 %v81, 1.442695
    %v87 = vpow.pop %v86
    %v88 = vmul.f32 %v82, 1.442695
    %v89 = vpow.pop %v88
    %v90 = vmul.f32 %v83, 1.442695
    %v91 = vpow.pop %v90
    %v92 = vmul.f32 %v84, 1.442695
    %v93 = vpow.pop %v92
    %v94 = vmul.f32 %v85, 1.442695
    %v95 = vpow.pop %v94
    %v96 = vadd.f32 %v87, 1.0
    %v97 = vadd.f32 %v89, 1.0
    %v98 = vadd.f32 %v91, 1.0
    %v99 = vadd.f32 %v93, 1.0
    %v100 = vadd.f32 %v95, 1.0
    %v101 = vlog2.pop %v96
    %v102 = vmul.f32 %v101, 0.6931472
    %v103 = vlog2.pop %v97
    %v104 = vmul.f32 %v103, 0.6931472
    %v105 = vlog2.pop %v98
    %v106 = vmul.f32 %v105, 0.6931472
    %v107 = vlog2.pop %v99
    %v108 = vmul.f32 %v107, 0.6931472
    %v109 = vlog2.pop %v100
    %v110 = vmul.f32 %v109, 0.6931472
    %v111 = vmin.f32 %v65, 0.0
    %v112 = vmin.f32 %v66, 0.0
    %v113 = vmin.f32 %v67, 0.0
    %v114 = vmin.f32 %v68, 0.0
    %v115 = vmin.f32 %v69, 0.0
    %v116 = vsub.f32 %v111, %v102
    %v117 = vsub.f32 %v112, %v104
    %v118 = vsub.f32 %v113, %v106
    %v119 = vsub.f32 %v114, %v108
    %v120 = vsub.f32 %v115, %v110
    %v121 = vmax.f32 %v116, -27.631021
    %v122 = vmax.f32 %v117, -27.631021
    %v123 = vmax.f32 %v118, -27.631021
    %v124 = vmax.f32 %v119, -27.631021
    %v125 = vmax.f32 %v120, -27.631021
    %v126 = vmax.f32 %v65, 0.0
    %v127 = vmax.f32 %v66, 0.0
    %v128 = vmax.f32 %v67, 0.0
    %v129 = vmax.f32 %v68, 0.0
    %v130 = vmax.f32 %v69, 0.0
    %v131 = vsub.f32 0.0, %v126
    %v132 = vsub.f32 0.0, %v127
    %v133 = vsub.f32 0.0, %v128
    %v134 = vsub.f32 0.0, %v129
    %v135 = vsub.f32 0.0, %v130
    %v136 = vsub.f32 %v131, %v102
    %v137 = vsub.f32 %v132, %v104
    %v138 = vsub.f32 %v133, %v106
    %v139 = vsub.f32 %v134, %v108
    %v140 = vsub.f32 %v135, %v110
    %v141 = vmax.f32 %v136, -27.631021
    %v142 = vmax.f32 %v137, -27.631021
    %v143 = vmax.f32 %v138, -27.631021
    %v144 = vmax.f32 %v139, -27.631021
    %v145 = vmax.f32 %v140, -27.631021
    %v146 = vmul.f32 %v70, 2.0
    %v147 = vmul.f32 %v71, 2.0
    %v148 = vmul.f32 %v72, 2.0
    %v149 = vmul.f32 %v73, 2.0
    %v150 = vmul.f32 %v74, 2.0
    %v151 = vsub.f32 1.0, %v146
    %v152 = vsub.f32 1.0, %v147
    %v153 = vsub.f32 1.0, %v148
    %v154 = vsub.f32 1.0, %v149
    %v155 = vsub.f32 1.0, %v150
    %v157 = vperm.slane %v75, 0
    %v158 = vperm.slane %v75, 1
    %v159 = vperm.slane %v75, 2
    %v160 = vperm.slane %v75, 3
    %v161 = vperm.slane %v75, 4
    %v167 = vmul.f32 %v151, %v157
    %v168 = vmul.f32 %v152, %v158
    %v169 = vmul.f32 %v153, %v159
    %v170 = vmul.f32 %v154, %v160
    %v171 = vmul.f32 %v155, %v161
    %v172 = vadd.f32 %v70, %v167
    %v173 = vadd.f32 %v71, %v168
    %v174 = vadd.f32 %v72, %v169
    %v175 = vadd.f32 %v73, %v170
    %v176 = vadd.f32 %v74, %v171
    %v177 = vmul.f32 %v172, 1.442695
    %v178 = vpow.pop %v177
    %v179 = vmul.f32 %v173, 1.442695
    %v180 = vpow.pop %v179
    %v181 = vmul.f32 %v174, 1.442695
    %v182 = vpow.pop %v181
    %v183 = vmul.f32 %v175, 1.442695
    %v184 = vpow.pop %v183
    %v185 = vmul.f32 %v176, 1.442695
    %v186 = vpow.pop %v185
    %v187 = vmul.f32 %v70, %v121
    %v188 = vmul.f32 %v71, %v122
    %v189 = vmul.f32 %v72, %v123
    %v190 = vmul.f32 %v73, %v124
    %v191 = vmul.f32 %v74, %v125
    %v192 = vmul.f32 %v178, %v187
    %v193 = vmul.f32 %v180, %v188
    %v194 = vmul.f32 %v182, %v189
    %v195 = vmul.f32 %v184, %v190
    %v196 = vmul.f32 %v186, %v191
    %v197 = vsub.f32 1.0, %v70
    %v198 = vsub.f32 1.0, %v71
    %v199 = vsub.f32 1.0, %v72
    %v200 = vsub.f32 1.0, %v73
    %v201 = vsub.f32 1.0, %v74
    %v202 = vmul.f32 %v197, %v141
    %v203 = vmul.f32 %v198, %v142
    %v204 = vmul.f32 %v199, %v143
    %v205 = vmul.f32 %v200, %v144
    %v206 = vmul.f32 %v201, %v145
    %v207 = vadd.f32 %v192, %v202
    %v208 = vadd.f32 %v193, %v203
    %v209 = vadd.f32 %v194, %v204
    %v210 = vadd.f32 %v195, %v205
    %v211 = vadd.f32 %v196, %v206
    %p212 = scmp.lt.s32.totalorder %s55, 0
    // Predicated region
    $region18: #{my_loss.1} parent=1 // pred_check
      %p213 = pneg %p212
    $region19: #{my_loss.1} parent=1 // pred_check_branch
      %215 = sbr.rel (%p213) target = $region21
    $region20: #{my_loss.1} parent=1 // pred_region
      %v216 = vld [vmem:[#allocation2] sm:$0x1f]
      %v217 = vrot.slane %v207, 4
      %v218 = vadd.f32 %v207, %v217
      %v219 = vrot.slane %v218, 2
      %v220 = vadd.f32 %v218, %v219
      %v221 = vrot.slane %v220, 1
      %v222 = vadd.f32 %v220, %v221
      %v223 = vrot.slane %v208, 4
      %v224 = vadd.f32 %v208, %v223
      %v225 = vrot.slane %v224, 2
      %v226 = vadd.f32 %v224, %v225
      %v227 = vrot.slane %v226, 1
      %v228 = vadd.f32 %v226, %v227
      %v229 = vrot.slane %v209, 4
      %v230 = vadd.f32 %v209, %v229
      %v231 = vrot.slane %v230, 2
      %v232 = vadd.f32 %v230, %v231
      %v233 = vrot.slane %v232, 1
      %v234 = vadd.f32 %v232, %v233
      %v235 = vrot.slane %v210, 4
      %v236 = vadd.f32 %v210, %v235
      %v237 = vrot.slane %v236, 2
      %v238 = vadd.f32 %v236, %v237
      %v239 = vrot.slane %v238, 1
      %v240 = vadd.f32 %v238, %v239
      %v241 = vrot.slane %v211, 4
      %v242 = vadd.f32 %v211, %v241
      %v243 = vrot.slane %v242, 2
      %v244 = vadd.f32 %v242, %v243
      %v245 = vrot.slane %v244, 1
      %v246 = vadd.f32 %v244, %v245
      %v252 = vrot.slane %v228, 7
      %v253 = vrot.slane %v234, 6
      %v254 = vrot.slane %v240, 5
      %v255 = vrot.slane %v246, 4
      %vm256 = vcmask 1040384
      %v257 = vsel %vm256, %v222, %v252
      %vm258 = vcmask 1041408
      %v259 = vsel %vm258, %v257, %v253
      %vm260 = vcmask 1043459
      %v261 = vsel %vm260, %v254, %v255
      %vm262 = vcmask 1042432
      %v263 = vsel %vm262, %v259, %v261
      %v265 = vadd.f32 %v216, %v263
      %v266 = vlaneseq
      %vm267 = vcmp.ge.s32.totalorder %v266, 0
      %vm268 = vcmp.lt.s32.totalorder %v266, 640
      %vm269 = vmand %vm267, %vm268
      %270 = vst.msk [vmem:[#allocation2] sm:$0x1f] %vm269, %v265
    $region21: #{my_loss.1} parent=1 // pred_fallthru
      _
    %p271 = scmp.ge.s32.totalorder %s55, 0
    // Predicated region
    $region22: #{my_loss.1} parent=1 // pred_check
      %p272 = pneg %p271
    $region23: #{my_loss.1} parent=1 // pred_check_branch
      %274 = sbr.rel (%p272) target = $region25
    $region24: #{my_loss.1} parent=1 // pred_region
      %s275 = smul.u32 %s55, 8
      %v276 = vlaneseq
      %v277 = vshrl.u32 %v276, 7
      %v278 = vstv %s275
      %v279 = vadd.s32 %v278, %v277
      %v280 = vlaneseq
      %v281 = vand.u32 %v280, 127
      %v282 = vadd.s32 %v281, 128
      %v283 = vadd.s32 %v281, 256
      %v284 = vadd.s32 %v281, 384
      %v285 = vadd.s32 %v281, 512
      %vm286 = vcmp.lt.s32.totalorder %v279, 0
      %vm287 = vcmp.eq.s32.totalorder %v279, 0
      %vm288 = vcmp.lt.s32.totalorder %v281, 320
      %vm289 = vcmp.lt.s32.totalorder %v282, 320
      %vm290 = vcmp.lt.s32.totalorder %v283, 320
      %vm291 = vcmp.lt.s32.totalorder %v284, 320
      %vm292 = vcmp.lt.s32.totalorder %v285, 320
      %vm293 = vmand %vm287, %vm288
      %vm294 = vmand %vm287, %vm289
      %vm295 = vmand %vm287, %vm290
      %vm296 = vmand %vm287, %vm291
      %vm297 = vmand %vm287, %vm292
      %vm298 = vmor %vm286, %vm293
      %vm299 = vmor %vm286, %vm294
      %vm300 = vmor %vm286, %vm295
      %vm301 = vmor %vm286, %vm296
      %vm302 = vmor %vm286, %vm297
      %v303 = vsel %vm298, %v207, 0.0
      %v304 = vsel %vm299, %v208, 0.0
      %v305 = vsel %vm300, %v209, 0.0
      %v306 = vsel %vm301, %v210, 0.0
      %v307 = vsel %vm302, %v211, 0.0
      %v308 = vld [vmem:[#allocation2] sm:$0x1f]
      %v309 = vrot.slane %v303, 4
      %v310 = vadd.f32 %v303, %v309
      %v311 = vrot.slane %v310, 2
      %v312 = vadd.f32 %v310, %v311
      %v313 = vrot.slane %v312, 1
      %v314 = vadd.f32 %v312, %v313
      %v315 = vrot.slane %v304, 4
      %v316 = vadd.f32 %v304, %v315
      %v317 = vrot.slane %v316, 2
      %v318 = vadd.f32 %v316, %v317
      %v319 = vrot.slane %v318, 1
      %v320 = vadd.f32 %v318, %v319
      %v321 = vrot.slane %v305, 4
      %v322 = vadd.f32 %v305, %v321
      %v323 = vrot.slane %v322, 2
      %v324 = vadd.f32 %v322, %v323
      %v325 = vrot.slane %v324, 1
      %v326 = vadd.f32 %v324, %v325
      %v327 = vrot.slane %v306, 4
      %v328 = vadd.f32 %v306, %v327
      %v329 = vrot.slane %v328, 2
      %v330 = vadd.f32 %v328, %v329
      %v331 = vrot.slane %v330, 1
      %v332 = vadd.f32 %v330, %v331
      %v333 = vrot.slane %v307, 4
      %v334 = vadd.f32 %v307, %v333
      %v335 = vrot.slane %v334, 2
      %v336 = vadd.f32 %v334, %v335
      %v337 = vrot.slane %v336, 1
      %v338 = vadd.f32 %v336, %v337
      %v344 = vrot.slane %v320, 7
      %v345 = vrot.slane %v326, 6
      %v346 = vrot.slane %v332, 5
      %v347 = vrot.slane %v338, 4
      %vm348 = vcmask 1040384
      %v349 = vsel %vm348, %v314, %v344
      %vm350 = vcmask 1041408
      %v351 = vsel %vm350, %v349, %v345
      %vm352 = vcmask 1043459
      %v353 = vsel %vm352, %v346, %v347
      %vm354 = vcmask 1042432
      %v355 = vsel %vm354, %v351, %v353
      %v357 = vadd.f32 %v308, %v355
      %v358 = vlaneseq
      %vm359 = vcmp.ge.s32.totalorder %v358, 0
      %vm360 = vcmp.lt.s32.totalorder %v358, 640
      %vm361 = vmand %vm359, %vm360
      %362 = vst.msk [vmem:[#allocation2] sm:$0x1f] %vm361, %v357
    $region25: #{my_loss.1} parent=1 // pred_fallthru
      _
    // Predicated region
    $region26: #{my_loss.1} parent=1 // pred_check
      %p363 = pneg %p56
    $region27: #{my_loss.1} parent=1 // pred_check_branch
      %365 = sbr.rel (%p363) target = $region29
    $region28: #{my_loss.1} parent=1 // pred_region
      %v366 = vld [vmem:[#allocation2] sm:$0x1f]
      %v368 = vperm.slane %v366, 0
      %v369 = vperm.slane %v366, 1
      %v370 = vperm.slane %v366, 2
      %v371 = vperm.slane %v366, 3
      %v372 = vperm.slane %v366, 4
      %vm378 = vcmask 1040384
      %v379 = vsel %vm378, %v368, 0.0
      %v380 = vsel %vm378, %v369, 0.0
      %v381 = vadd.f32 %v379, %v380
      %v382 = vsel %vm378, %v370, 0.0
      %v383 = vadd.f32 %v381, %v382
      %v384 = vsel %vm378, %v371, 0.0
      %v385 = vadd.f32 %v383, %v384
      %v386 = vsel %vm378, %v372, 0.0
      %v387 = vadd.f32 %v385, %v386
      %388 = vadd.xlane.f32.xlu0 %v387
      %v389 = vpop.xlane.xlu0 %388
      %v390 = vrot.slane %v389, 4
      %v391 = vadd.f32 %v389, %v390
      %v392 = vrot.slane %v391, 2
      %v393 = vadd.f32 %v391, %v392
      %v394 = vrot.slane %v393, 1
      %v395 = vadd.f32 %v393, %v394
      %s396 = vtos %v395
      %s397 = scalar_lea.smem [#allocation3], 0
      %398 = sst [smem:[%s397]] %s396
    $region29: #{my_loss.1} parent=1 // pred_fallthru
      _
    // Predicated region
    $region30: #{my_loss.1} parent=1 // pred_check
      _
    $region31: #{my_loss.1} parent=1 // pred_check_branch
      %400 = sbr.rel (0) target = $region33
    $region32: #{my_loss.1} parent=1 // pred_region
      %402 = vsyncadd [#allocation4], 0
      %s404 = sshll.u32 %s3, 4
      %s405 = int_to_ptr.hbm [resolvable:$true] %s404
      %407 = dma.smem_to_hbm [#allocation3], 16, %s405, [#allocation4]
    $region33: #{my_loss.1} parent=1 // pred_fallthru
      _
    // Predicated region
    $region34: #{my_loss.1} parent=1 // pred_check
      _
    $region35: #{my_loss.1} parent=1 // pred_check_branch
      %409 = sbr.rel (0) target = $region37
    $region36: #{my_loss.1} parent=1 // pred_region
      %411 = dma.done [#allocation4], 16
    $region37: #{my_loss.1} parent=1 // pred_fallthru
      _
    %412 = sfence
    %413 = vsyncpa [#allocation4], 1

</llo_original>
